<compile_context>
chip_gen: v7x
topology: tpu7x:2x2x1
jax: 0.10.0
libtpu: 0.0.40
codegen_flags: <defaults>
</compile_context>

<pallas_src>
import math
import functools

import jax
import jax.numpy as jnp
from jax.experimental import pallas as pl
from jax.experimental.pallas import tpu as pltpu


# ----------------------------- tables (plain JAX) -----------------------------

def sincos_jax(t, dim, base=10000.0):
    """Mirror of the PyTorch sincos(): sin/cos of shape (t, dim), repeat_interleave(2)."""
    pos = jnp.arange(t, dtype=jnp.float32)[:, None]                       # (t, 1)
    inv = 1.0 / base ** (jnp.arange(0, dim, 2, dtype=jnp.float32) / dim)  # (dim/2,)
    ang = pos * inv                                                       # (t, dim/2)
    sin = jnp.repeat(jnp.sin(ang), 2, axis=-1)                            # (t, dim)
    cos = jnp.repeat(jnp.cos(ang), 2, axis=-1)                            # (t, dim)
    return sin, cos


def _rotate_half(x):
    h = x.shape[-1] // 2
    return jnp.concatenate([-x[..., h:], x[..., :h]], axis=-1)


# ------------------------------- Pallas kernel ------------------------------

def _attn_kernel(x_ref, wq_ref, bq_ref, wkv_ref, bkv_ref, woh_ref, bo_ref,
                 cos_ref, sinr_ref, mask_ref, o_ref, k_scr, v_scr,
                 *, num_heads, head_dim, q_tile):
    H, dh = num_heads, head_dim
    d = H * dh
    t = x_ref.shape[1]
    tq = q_tile
    qi = pl.program_id(1)
    q0 = pl.multiple_of(qi * tq, tq)
    half = dh // 2

    def to_heads(y, rows):
        # (rows, d) -> (H, rows, dh); one relayout per tensor.
        return jnp.transpose(y.reshape(rows, H, dh), (1, 0, 2))

    def rot_half(z):
        # rotate_half WITHOUT the sign (the sign is folded into the sin table).
        if dh % 128 == 0:
            return pltpu.roll(z, shift=half, axis=-1)       # XLU slot, lane-aligned dh
        return jnp.concatenate([z[..., half:], z[..., :half]], axis=-1)

    # ---- K/V projection + K-RoPE for the whole sequence, once per batch row ----
    @pl.when(qi == 0)
    def _():
        xb = x_ref[0].astype(jnp.bfloat16)                   # cast in-kernel (VPU)
        kv = jnp.dot(xb, wkv_ref[...],
                     preferred_element_type=jnp.float32) + bkv_ref[...]   # (t, 2d) f32
        k = to_heads(kv[:, :d], t)                           # (H, t, dh) f32
        v = to_heads(kv[:, d:], t)
        k = k * cos_ref[...] + rot_half(k) * sinr_ref[...]   # RoPE in f32
        k_scr[...] = k.astype(jnp.bfloat16)
        v_scr[...] = v.astype(jnp.bfloat16)

    # ---- Q projection + RoPE for this q tile (1/sqrt(dh) folded into q) ----
    xq = x_ref[0, pl.ds(q0, tq), :].astype(jnp.bfloat16)     # (tq, d)
    q = jnp.dot(xq, wq_ref[...], preferred_element_type=jnp.float32) + bq_ref[...]
    q = to_heads(q, tq)                                      # (H, tq, dh) f32
    cos_q = cos_ref[pl.ds(q0, tq), :]
    sin_q = sinr_ref[pl.ds(q0, tq), :]
    q = (q * cos_q + rot_half(q) * sin_q) * (1.0 / math.sqrt(dh))

    # ---- scores (H, tq, t): bf16 MXU operands, f32 accumulation ----
    s = jnp.einsum("hqd,hkd->hqk", q.astype(jnp.bfloat16), k_scr[...],
                   preferred_element_type=jnp.float32)

    # masked_fill(mask, -1e4); mask block holds only this q-tile's rows.
    s = jnp.where(mask_ref[...][None, :, :] > 0.0, -10000.0, s)

    # ---- softmax: stable f32, EUP reciprocal, immediate bf16 before PV ----
    s = s - jnp.max(s, axis=-1, keepdims=True)
    s = jnp.exp(s)
    p = (s * pl.reciprocal(jnp.sum(s, axis=-1, keepdims=True), approx=True)
         ).astype(jnp.bfloat16)

    # ---- PV, then per-head output projection; heads merged in the f32 sum ----
    pv = jnp.einsum("hqk,hkd->hqd", p, v_scr[...],
                    preferred_element_type=jnp.float32)       # (H, tq, dh) f32
    y = jnp.einsum("hqd,hdo->hqo", pv.astype(jnp.bfloat16), woh_ref[...],
                   preferred_element_type=jnp.float32)        # (H, tq, d) f32
    y = jnp.sum(y, axis=0) + bo_ref[...]                      # (tq, d)
    o_ref[0] = y.astype(o_ref.dtype)


# --------------------------------- wrappers ----------------------------------

def prepare_attn_params(params, num_heads):
    """One-time parameter preprocessing (hoisted out of the forward path):
    transpose to (in, out), fuse [Wk|Wv], split Wo per head, cast MXU operands to bf16."""
    d = params["wq"].shape[0]
    dh = d // num_heads
    return {
        "wq_t": params["wq"].T.astype(jnp.bfloat16),                          # (d, d)
        "bq": params["bq"].reshape(1, d).astype(jnp.float32),
        "wkv_t": jnp.concatenate([params["wk"].T, params["wv"].T],
                                 axis=1).astype(jnp.bfloat16),                # (d, 2d)
        "bkv": jnp.concatenate([params["bk"], params["bv"]]
                               ).reshape(1, 2 * d).astype(jnp.float32),
        "wo_h": params["wo"].T.reshape(num_heads, dh, d).astype(jnp.bfloat16),  # (H, dh, d)
        "bo": params["bo"].reshape(1, d).astype(jnp.float32),
    }


def attn_forward(x, prepped, mask, num_heads):
    b, t, d = x.shape
    dh = d // num_heads

    sin, cos = sincos_jax(t, dh)
    half = dh // 2
    # Fold the rotate_half sign into the sin table: kernel's rotation is unsigned.
    sin_rot = jnp.concatenate([-sin[:, :half], sin[:, half:]], axis=-1)

    # q-tile: 256 suits the 256x256 MXUs on v6e/v7x (prefer 128 on v5e); degenerates
    # to the full sequence at the tiny benchmark shape.
    q_tile = t if t <= 256 else 256
    assert t % q_tile == 0, "sequence length must be a multiple of the q tile"
    nq = t // q_tile

    mask_f = mask.astype(jnp.float32)        # 1.0 = masked; DMA'd (q_tile, t) per step

    kernel = functools.partial(_attn_kernel, num_heads=num_heads, head_dim=dh,
                               q_tile=q_tile)

    res2 = lambda *_: (0, 0)                 # grid-invariant 2-D operands
    res3 = lambda *_: (0, 0, 0)
    single = pl.Buffered(1)                  # no double-buffering for invariant blocks

    return pl.pallas_call(
        kernel,
        out_shape=jax.ShapeDtypeStruct((b, t, d), jnp.float32),
        grid=(b, nq),
        in_specs=[
            pl.BlockSpec((1, t, d), lambda bi, qi: (bi, 0, 0)),              # x (f32)
            pl.BlockSpec((d, d), res2, pipeline_mode=single),                # Wq^T (bf16)
            pl.BlockSpec((1, d), res2, pipeline_mode=single),                # bq
            pl.BlockSpec((d, 2 * d), res2, pipeline_mode=single),            # [Wk|Wv]^T (bf16)
            pl.BlockSpec((1, 2 * d), res2, pipeline_mode=single),            # [bk|bv]
            pl.BlockSpec((num_heads, dh, d), res3, pipeline_mode=single),    # Wo^T per head (bf16)
            pl.BlockSpec((1, d), res2, pipeline_mode=single),                # bo
            pl.BlockSpec((t, dh), res2, pipeline_mode=single),               # cos
            pl.BlockSpec((t, dh), res2, pipeline_mode=single),               # sin (sign-folded)
            pl.BlockSpec((q_tile, t), lambda bi, qi: (qi, 0)),               # mask rows
        ],
        out_specs=pl.BlockSpec((1, q_tile, d), lambda bi, qi: (bi, qi, 0)),
        scratch_shapes=[pltpu.VMEM((num_heads, t, dh), jnp.bfloat16),        # K (rope'd)
                        pltpu.VMEM((num_heads, t, dh), jnp.bfloat16)],       # V
        compiler_params=pltpu.CompilerParams(
            dimension_semantics=("parallel", "arbitrary")),
    )(x, prepped["wq_t"], prepped["bq"], prepped["wkv_t"], prepped["bkv"],
      prepped["wo_h"], prepped["bo"], cos, sin_rot, mask_f)


# ---------------------------- pure-JAX reference -----------------------------

def attn_reference(x, params, mask, num_heads):
    b, t, d = x.shape
    dh = d // num_heads
    q = x @ params["wq"].T + params["bq"]
    k = x @ params["wk"].T + params["bk"]
    v = x @ params["wv"].T + params["bv"]
    q = q.reshape(b, t, num_heads, dh).transpose(0, 2, 1, 3)
    k = k.reshape(b, t, num_heads, dh).transpose(0, 2, 1, 3)
    v = v.reshape(b, t, num_heads, dh).transpose(0, 2, 1, 3)
    sin, cos = sincos_jax(t, dh)
    q = q * cos + _rotate_half(q) * sin
    k = k * cos + _rotate_half(k) * sin
    a = jnp.einsum("bhqd,bhkd->bhqk", q, k) / math.sqrt(dh)
    a = jnp.where(mask[None, None], -10000.0, a)
    p = jax.nn.softmax(a, axis=-1)
    out = jnp.einsum("bhqk,bhkd->bhqd", p, v).transpose(0, 2, 1, 3).reshape(b, t, d)
    return out @ params["wo"].T + params["bo"]


# ----------------------------------- main ------------------------------------

if __name__ == "__main__":
    B, T, D, H = 2, 8, 32, 4

    key = jax.random.PRNGKey(0)
    keys = jax.random.split(key, 10)
    scale = 1.0 / math.sqrt(D)
    params = {
        "wq": jax.random.uniform(keys[0], (D, D), jnp.float32, -scale, scale),
        "bq": jax.random.uniform(keys[1], (D,), jnp.float32, -scale, scale),
        "wk": jax.random.uniform(keys[2], (D, D), jnp.float32, -scale, scale),
        "bk": jax.random.uniform(keys[3], (D,), jnp.float32, -scale, scale),
        "wv": jax.random.uniform(keys[4], (D, D), jnp.float32, -scale, scale),
        "bv": jax.random.uniform(keys[5], (D,), jnp.float32, -scale, scale),
        "wo": jax.random.uniform(keys[6], (D, D), jnp.float32, -scale, scale),
        "bo": jax.random.uniform(keys[7], (D,), jnp.float32, -scale, scale),
    }
    x = jax.random.normal(keys[8], (B, T, D), jnp.float32)
    # Causal mask: True (1.0) above the diagonal => masked.
    mask = jnp.triu(jnp.ones((T, T), dtype=jnp.bool_), k=1)

    prepped = prepare_attn_params(params, H)      # one-time, outside forward path
    y = attn_forward(x, prepped, mask, H)
    jax.block_until_ready(y)

    y_ref = attn_reference(x, params, mask, H)
    assert y.shape == (B, T, D)
    assert jnp.allclose(y, y_ref, atol=2e-2, rtol=2e-2), float(jnp.max(jnp.abs(y - y_ref)))

    print("KERNEL_OK")
</pallas_src>

<mosaic_0001>
module attributes {stable_mosaic.version = 11 : i64} {
  func.func @_attn_kernel(%arg0: i32, %arg1: i32, %arg2: memref<1x8x32xf32, #tpu.memory_space<vmem>>, %arg3: memref<32x32xbf16, #tpu.memory_space<vmem>>, %arg4: memref<1x32xf32, #tpu.memory_space<vmem>>, %arg5: memref<32x64xbf16, #tpu.memory_space<vmem>>, %arg6: memref<1x64xf32, #tpu.memory_space<vmem>>, %arg7: memref<4x8x32xbf16, #tpu.memory_space<vmem>>, %arg8: memref<1x32xf32, #tpu.memory_space<vmem>>, %arg9: memref<8x8xf32, #tpu.memory_space<vmem>>, %arg10: memref<8x8xf32, #tpu.memory_space<vmem>>, %arg11: memref<8x8xf32, #tpu.memory_space<vmem>>, %arg12: memref<1x8x32xf32, #tpu.memory_space<vmem>>, %arg13: memref<4x8x8xbf16, #tpu.memory_space<vmem>>, %arg14: memref<4x8x8xbf16, #tpu.memory_space<vmem>>) attributes {dimension_semantics = [#tpu.dimension_semantics<parallel>, #tpu.dimension_semantics<arbitrary>], iteration_bounds = array<i64: 2, 1>, scalar_prefetch = 0 : i64, scratch_operands = 2 : i64, tpu.core_type = #tpu.core_type<tc>, window_params = [{transform_indices = @transform_0, window_bounds = array<i64: 1, 8, 32>}, {pipeline_mode = #tpu.pipeline_mode<synchronous>, transform_indices = @transform_1, window_bounds = array<i64: 32, 32>}, {pipeline_mode = #tpu.pipeline_mode<synchronous>, transform_indices = @transform_2, window_bounds = array<i64: 1, 32>}, {pipeline_mode = #tpu.pipeline_mode<synchronous>, transform_indices = @transform_3, window_bounds = array<i64: 32, 64>}, {pipeline_mode = #tpu.pipeline_mode<synchronous>, transform_indices = @transform_4, window_bounds = array<i64: 1, 64>}, {pipeline_mode = #tpu.pipeline_mode<synchronous>, transform_indices = @transform_5, window_bounds = array<i64: 4, 8, 32>}, {pipeline_mode = #tpu.pipeline_mode<synchronous>, transform_indices = @transform_6, window_bounds = array<i64: 1, 32>}, {pipeline_mode = #tpu.pipeline_mode<synchronous>, transform_indices = @transform_7, window_bounds = array<i64: 8, 8>}, {pipeline_mode = #tpu.pipeline_mode<synchronous>, transform_indices = @transform_8, window_bounds = array<i64: 8, 8>}, {transform_indices = @transform_9, window_bounds = array<i64: 8, 8>}, {transform_indices = @transform_10, window_bounds = array<i64: 1, 8, 32>}]} {
    %c8_i32 = arith.constant 8 : i32
    %0 = arith.muli %arg1, %c8_i32 : i32
    %1 = tpu.assume_multiple %0, 8 : i32
    %c0_i32 = arith.constant 0 : i32
    %2 = arith.cmpi eq, %arg1, %c0_i32 : i32
    %3 = arith.extui %2 : i1 to i32
    %c0_i32_0 = arith.constant 0 : i32
    %4 = arith.cmpi ne, %3, %c0_i32_0 : i32
    scf.if %4 {
      %c0_33 = arith.constant 0 : index
      %c0_34 = arith.constant 0 : index
      %c0_35 = arith.constant 0 : index
      %66 = vector.load %arg2[%c0_33, %c0_34, %c0_35] : memref<1x8x32xf32, #tpu.memory_space<vmem>>, vector<1x8x32xf32>
      %67 = vector.shape_cast %66 : vector<1x8x32xf32> to vector<8x32xf32>
      %68 = arith.truncf %67 : vector<8x32xf32> to vector<8x32xbf16>
      %c0_36 = arith.constant 0 : index
      %c0_37 = arith.constant 0 : index
      %69 = vector.load %arg5[%c0_36, %c0_37] : memref<32x64xbf16, #tpu.memory_space<vmem>>, vector<32x64xbf16>
      %cst_38 = arith.constant dense<0.000000e+00> : vector<8x64xf32>
      %70 = tpu.matmul %68, %69, %cst_38 {dimension_numbers = #tpu.dot_dimension_numbers<[1], [0], [0], [1], [0, 0, 1, 1], [], []>} : vector<8x32xbf16>, vector<32x64xbf16>, vector<8x64xf32> -> vector<8x64xf32>
      %c0_39 = arith.constant 0 : index
      %c0_40 = arith.constant 0 : index
      %71 = vector.load %arg6[%c0_39, %c0_40] : memref<1x64xf32, #tpu.memory_space<vmem>>, vector<1x64xf32>
      %72 = vector.broadcast %71 : vector<1x64xf32> to vector<8x64xf32>
      %73 = arith.addf %70, %72 : vector<8x64xf32>
      %74 = vector.extract_strided_slice %73 {offsets = [0, 0], sizes = [8, 32], strides = [1, 1]} : vector<8x64xf32> to vector<8x32xf32>
      %75 = vector.shape_cast %74 : vector<8x32xf32> to vector<8x4x8xf32>
      %76 = tpu.transpose %75, [1, 0, 2] : vector<8x4x8xf32> -> vector<4x8x8xf32>
      %77 = vector.extract_strided_slice %73 {offsets = [0, 32], sizes = [8, 32], strides = [1, 1]} : vector<8x64xf32> to vector<8x32xf32>
      %78 = vector.shape_cast %77 : vector<8x32xf32> to vector<8x4x8xf32>
      %79 = tpu.transpose %78, [1, 0, 2] : vector<8x4x8xf32> -> vector<4x8x8xf32>
      %c0_41 = arith.constant 0 : index
      %c0_42 = arith.constant 0 : index
      %80 = vector.load %arg9[%c0_41, %c0_42] : memref<8x8xf32, #tpu.memory_space<vmem>>, vector<8x8xf32>
      %81 = vector.shape_cast %80 : vector<8x8xf32> to vector<1x8x8xf32>
      %82 = vector.broadcast %81 : vector<1x8x8xf32> to vector<4x8x8xf32>
      %83 = arith.mulf %76, %82 : vector<4x8x8xf32>
      %84 = vector.extract_strided_slice %76 {offsets = [0, 0, 4], sizes = [4, 8, 4], strides = [1, 1, 1]} : vector<4x8x8xf32> to vector<4x8x4xf32>
      %85 = vector.extract_strided_slice %76 {offsets = [0, 0, 0], sizes = [4, 8, 4], strides = [1, 1, 1]} : vector<4x8x8xf32> to vector<4x8x4xf32>
      %86 = tpu.concatenate %84, %85 in 2 : vector<4x8x4xf32>, vector<4x8x4xf32> -> vector<4x8x8xf32>
      %c0_43 = arith.constant 0 : index
      %c0_44 = arith.constant 0 : index
      %87 = vector.load %arg10[%c0_43, %c0_44] : memref<8x8xf32, #tpu.memory_space<vmem>>, vector<8x8xf32>
      %88 = vector.shape_cast %87 : vector<8x8xf32> to vector<1x8x8xf32>
      %89 = vector.broadcast %88 : vector<1x8x8xf32> to vector<4x8x8xf32>
      %90 = arith.mulf %86, %89 : vector<4x8x8xf32>
      %91 = arith.addf %83, %90 : vector<4x8x8xf32>
      %92 = arith.truncf %91 : vector<4x8x8xf32> to vector<4x8x8xbf16>
      %c0_45 = arith.constant 0 : index
      %c0_46 = arith.constant 0 : index
      %c0_47 = arith.constant 0 : index
      %93 = vector.load %arg13[%c0_45, %c0_46, %c0_47] : memref<4x8x8xbf16, #tpu.memory_space<vmem>>, vector<4x8x8xbf16>
      tpu.vector_store %arg13[%c0_45, %c0_46, %c0_47], %92 {strides = array<i32>} : memref<4x8x8xbf16, #tpu.memory_space<vmem>>, vector<4x8x8xbf16>,
      %94 = arith.truncf %79 : vector<4x8x8xf32> to vector<4x8x8xbf16>
      %c0_48 = arith.constant 0 : index
      %c0_49 = arith.constant 0 : index
      %c0_50 = arith.constant 0 : index
      %95 = vector.load %arg14[%c0_48, %c0_49, %c0_50] : memref<4x8x8xbf16, #tpu.memory_space<vmem>>, vector<4x8x8xbf16>
      tpu.vector_store %arg14[%c0_48, %c0_49, %c0_50], %94 {strides = array<i32>} : memref<4x8x8xbf16, #tpu.memory_space<vmem>>, vector<4x8x8xbf16>,
    } else {
    }
    %c0 = arith.constant 0 : index
    %5 = arith.index_cast %1 : i32 to index
    %c0_1 = arith.constant 0 : index
    %6 = vector.load %arg2[%c0, %5, %c0_1] : memref<1x8x32xf32, #tpu.memory_space<vmem>>, vector<1x8x32xf32>
    %7 = vector.shape_cast %6 : vector<1x8x32xf32> to vector<8x32xf32>
    %8 = arith.truncf %7 : vector<8x32xf32> to vector<8x32xbf16>
    %c0_2 = arith.constant 0 : index
    %c0_3 = arith.constant 0 : index
    %9 = vector.load %arg3[%c0_2, %c0_3] : memref<32x32xbf16, #tpu.memory_space<vmem>>, vector<32x32xbf16>
    %cst = arith.constant dense<0.000000e+00> : vector<8x32xf32>
    %10 = tpu.matmul %8, %9, %cst {dimension_numbers = #tpu.dot_dimension_numbers<[1], [0], [0], [1], [0, 0, 1, 1], [], []>} : vector<8x32xbf16>, vector<32x32xbf16>, vector<8x32xf32> -> vector<8x32xf32>
    %c0_4 = arith.constant 0 : index
    %c0_5 = arith.constant 0 : index
    %11 = vector.load %arg4[%c0_4, %c0_5] : memref<1x32xf32, #tpu.memory_space<vmem>>, vector<1x32xf32>
    %12 = vector.broadcast %11 : vector<1x32xf32> to vector<8x32xf32>
    %13 = arith.addf %10, %12 : vector<8x32xf32>
    %14 = vector.shape_cast %13 : vector<8x32xf32> to vector<8x4x8xf32>
    %15 = tpu.transpose %14, [1, 0, 2] : vector<8x4x8xf32> -> vector<4x8x8xf32>
    %16 = arith.index_cast %1 : i32 to index
    %c0_6 = arith.constant 0 : index
    %17 = vector.load %arg9[%16, %c0_6] : memref<8x8xf32, #tpu.memory_space<vmem>>, vector<8x8xf32>
    %18 = arith.index_cast %1 : i32 to index
    %c0_7 = arith.constant 0 : index
    %19 = vector.load %arg10[%18, %c0_7] : memref<8x8xf32, #tpu.memory_space<vmem>>, vector<8x8xf32>
    %20 = vector.shape_cast %17 : vector<8x8xf32> to vector<1x8x8xf32>
    %21 = vector.broadcast %20 : vector<1x8x8xf32> to vector<4x8x8xf32>
    %22 = arith.mulf %15, %21 : vector<4x8x8xf32>
    %23 = vector.extract_strided_slice %15 {offsets = [0, 0, 4], sizes = [4, 8, 4], strides = [1, 1, 1]} : vector<4x8x8xf32> to vector<4x8x4xf32>
    %24 = vector.extract_strided_slice %15 {offsets = [0, 0, 0], sizes = [4, 8, 4], strides = [1, 1, 1]} : vector<4x8x8xf32> to vector<4x8x4xf32>
    %25 = tpu.concatenate %23, %24 in 2 : vector<4x8x4xf32>, vector<4x8x4xf32> -> vector<4x8x8xf32>
    %26 = vector.shape_cast %19 : vector<8x8xf32> to vector<1x8x8xf32>
    %27 = vector.broadcast %26 : vector<1x8x8xf32> to vector<4x8x8xf32>
    %28 = arith.mulf %25, %27 : vector<4x8x8xf32>
    %29 = arith.addf %22, %28 : vector<4x8x8xf32>
    %cst_8 = arith.constant 0.353553385 : f32
    %30 = vector.broadcast %cst_8 : f32 to vector<4x8x8xf32>
    %31 = arith.mulf %29, %30 : vector<4x8x8xf32>
    %32 = arith.truncf %31 : vector<4x8x8xf32> to vector<4x8x8xbf16>
    %c0_9 = arith.constant 0 : index
    %c0_10 = arith.constant 0 : index
    %c0_11 = arith.constant 0 : index
    %33 = vector.load %arg13[%c0_9, %c0_10, %c0_11] : memref<4x8x8xbf16, #tpu.memory_space<vmem>>, vector<4x8x8xbf16>
    "tpu.trace_start"() <{level = 10 : i32, message = "hqd,hkd->hqk"}> : () -> ()
    %cst_12 = arith.constant dense<0.000000e+00> : vector<4x8x8xf32>
    %34 = tpu.matmul %32, %33, %cst_12 {dimension_numbers = #tpu.dot_dimension_numbers<[2], [2], [1], [1], [0, 0, 0, 1, 1, 1], [0], [0]>} : vector<4x8x8xbf16>, vector<4x8x8xbf16>, vector<4x8x8xf32> -> vector<4x8x8xf32>
    "tpu.trace_stop"() : () -> ()
    %c0_13 = arith.constant 0 : index
    %c0_14 = arith.constant 0 : index
    %35 = vector.load %arg11[%c0_13, %c0_14] : memref<8x8xf32, #tpu.memory_space<vmem>>, vector<8x8xf32>
    %36 = vector.shape_cast %35 : vector<8x8xf32> to vector<1x8x8xf32>
    %cst_15 = arith.constant 0.000000e+00 : f32
    %37 = vector.broadcast %cst_15 : f32 to vector<1x8x8xf32>
    %38 = arith.cmpf ogt, %36, %37 : vector<1x8x8xf32>
    %cst_16 = arith.constant -1.000000e+04 : f32
    %39 = vector.shape_cast %38 : vector<1x8x8xi1> to vector<1x8x8xi1>
    %40 = vector.broadcast %39 : vector<1x8x8xi1> to vector<4x8x8xi1>
    %41 = vector.broadcast %cst_16 : f32 to vector<4x8x8xf32>
    %42 = arith.select %40, %41, %34 : vector<4x8x8xi1>, vector<4x8x8xf32>
    %cst_17 = arith.constant dense<0xFF800000> : vector<4x8xf32>
    %43 = vector.multi_reduction <maximumf>, %42, %cst_17 [2] : vector<4x8x8xf32> to vector<4x8xf32>
    %44 = vector.shape_cast %43 : vector<4x8xf32> to vector<4x8x1xf32>
    %45 = vector.broadcast %44 : vector<4x8x1xf32> to vector<4x8x8xf32>
    %46 = arith.subf %42, %45 : vector<4x8x8xf32>
    %47 = math.exp %46 : vector<4x8x8xf32>
    %cst_18 = arith.constant dense<0.000000e+00> : vector<4x8xf32>
    %48 = vector.multi_reduction <add>, %47, %cst_18 [2] : vector<4x8x8xf32> to vector<4x8xf32>
    %49 = vector.shape_cast %48 : vector<4x8xf32> to vector<4x8x1xf32>
    %50 = tpu.reciprocal %49 {approx = true} : vector<4x8x1xf32> -> vector<4x8x1xf32>
    %51 = vector.broadcast %50 : vector<4x8x1xf32> to vector<4x8x8xf32>
    %52 = arith.mulf %47, %51 : vector<4x8x8xf32>
    %53 = arith.truncf %52 : vector<4x8x8xf32> to vector<4x8x8xbf16>
    %c0_19 = arith.constant 0 : index
    %c0_20 = arith.constant 0 : index
    %c0_21 = arith.constant 0 : index
    %54 = vector.load %arg14[%c0_19, %c0_20, %c0_21] : memref<4x8x8xbf16, #tpu.memory_space<vmem>>, vector<4x8x8xbf16>
    "tpu.trace_start"() <{level = 10 : i32, message = "hqk,hkd->hqd"}> : () -> ()
    %cst_22 = arith.constant dense<0.000000e+00> : vector<4x8x8xf32>
    %55 = tpu.matmul %53, %54, %cst_22 {dimension_numbers = #tpu.dot_dimension_numbers<[2], [1], [1], [2], [0, 0, 0, 1, 1, 2], [0], [0]>} : vector<4x8x8xbf16>, vector<4x8x8xbf16>, vector<4x8x8xf32> -> vector<4x8x8xf32>
    "tpu.trace_stop"() : () -> ()
    %56 = arith.truncf %55 : vector<4x8x8xf32> to vector<4x8x8xbf16>
    %c0_23 = arith.constant 0 : index
    %c0_24 = arith.constant 0 : index
    %c0_25 = arith.constant 0 : index
    %57 = vector.load %arg7[%c0_23, %c0_24, %c0_25] : memref<4x8x32xbf16, #tpu.memory_space<vmem>>, vector<4x8x32xbf16>
    "tpu.trace_start"() <{level = 10 : i32, message = "hqd,hdo->hqo"}> : () -> ()
    %cst_26 = arith.constant dense<0.000000e+00> : vector<4x8x32xf32>
    %58 = tpu.matmul %56, %57, %cst_26 {dimension_numbers = #tpu.dot_dimension_numbers<[2], [1], [1], [2], [0, 0, 0, 1, 1, 2], [0], [0]>} : vector<4x8x8xbf16>, vector<4x8x32xbf16>, vector<4x8x32xf32> -> vector<4x8x32xf32>
    "tpu.trace_stop"() : () -> ()
    %cst_27 = arith.constant dense<0.000000e+00> : vector<8x32xf32>
    %59 = vector.multi_reduction <add>, %58, %cst_27 [0] : vector<4x8x32xf32> to vector<8x32xf32>
    %c0_28 = arith.constant 0 : index
    %c0_29 = arith.constant 0 : index
    %60 = vector.load %arg8[%c0_28, %c0_29] : memref<1x32xf32, #tpu.memory_space<vmem>>, vector<1x32xf32>
    %61 = vector.broadcast %60 : vector<1x32xf32> to vector<8x32xf32>
    %62 = arith.addf %59, %61 : vector<8x32xf32>
    %c0_30 = arith.constant 0 : index
    %c0_31 = arith.constant 0 : index
    %c0_32 = arith.constant 0 : index
    %63 = vector.load %arg12[%c0_30, %c0_31, %c0_32] : memref<1x8x32xf32, #tpu.memory_space<vmem>>, vector<1x8x32xf32>
    %64 = vector.shape_cast %63 : vector<1x8x32xf32> to vector<8x32xf32>
    %65 = vector.shape_cast %62 : vector<8x32xf32> to vector<1x8x32xf32>
    tpu.vector_store %arg12[%c0_30, %c0_31, %c0_32], %65 {strides = array<i32>} : memref<1x8x32xf32, #tpu.memory_space<vmem>>, vector<1x8x32xf32>,
    return
  }
  func.func @transform_0(%arg0: i32, %arg1: i32) -> (i32, i32, i32) {
    %c0_i32 = arith.constant 0 : i32
    %c0_i32_0 = arith.constant 0 : i32
    %c0_i32_1 = arith.constant 0 : i32
    return %arg0, %c0_i32, %c0_i32_0 : i32, i32, i32
  }
  func.func @transform_1(%arg0: i32, %arg1: i32) -> (i32, i32) {
    %c0_i32 = arith.constant 0 : i32
    %c0_i32_0 = arith.constant 0 : i32
    %c0_i32_1 = arith.constant 0 : i32
    return %c0_i32, %c0_i32_0 : i32, i32
  }
  func.func @transform_2(%arg0: i32, %arg1: i32) -> (i32, i32) {
    %c0_i32 = arith.constant 0 : i32
    %c0_i32_0 = arith.constant 0 : i32
    %c0_i32_1 = arith.constant 0 : i32
    return %c0_i32, %c0_i32_0 : i32, i32
  }
  func.func @transform_3(%arg0: i32, %arg1: i32) -> (i32, i32) {
    %c0_i32 = arith.constant 0 : i32
    %c0_i32_0 = arith.constant 0 : i32
    %c0_i32_1 = arith.constant 0 : i32
    return %c0_i32, %c0_i32_0 : i32, i32
  }
  func.func @transform_4(%arg0: i32, %arg1: i32) -> (i32, i32) {
    %c0_i32 = arith.constant 0 : i32
    %c0_i32_0 = arith.constant 0 : i32
    %c0_i32_1 = arith.constant 0 : i32
    return %c0_i32, %c0_i32_0 : i32, i32
  }
  func.func @transform_5(%arg0: i32, %arg1: i32) -> (i32, i32, i32) {
    %c0_i32 = arith.constant 0 : i32
    %c0_i32_0 = arith.constant 0 : i32
    %c0_i32_1 = arith.constant 0 : i32
    %c0_i32_2 = arith.constant 0 : i32
    return %c0_i32, %c0_i32_0, %c0_i32_1 : i32, i32, i32
  }
  func.func @transform_6(%arg0: i32, %arg1: i32) -> (i32, i32) {
    %c0_i32 = arith.constant 0 : i32
    %c0_i32_0 = arith.constant 0 : i32
    %c0_i32_1 = arith.constant 0 : i32
    return %c0_i32, %c0_i32_0 : i32, i32
  }
  func.func @transform_7(%arg0: i32, %arg1: i32) -> (i32, i32) {
    %c0_i32 = arith.constant 0 : i32
    %c0_i32_0 = arith.constant 0 : i32
    %c0_i32_1 = arith.constant 0 : i32
    return %c0_i32, %c0_i32_0 : i32, i32
  }
  func.func @transform_8(%arg0: i32, %arg1: i32) -> (i32, i32) {
    %c0_i32 = arith.constant 0 : i32
    %c0_i32_0 = arith.constant 0 : i32
    %c0_i32_1 = arith.constant 0 : i32
    return %c0_i32, %c0_i32_0 : i32, i32
  }
  func.func @transform_9(%arg0: i32, %arg1: i32) -> (i32, i32) {
    %c0_i32 = arith.constant 0 : i32
    %c0_i32_0 = arith.constant 0 : i32
    return %arg1, %c0_i32 : i32, i32
  }
  func.func @transform_10(%arg0: i32, %arg1: i32) -> (i32, i32, i32) {
    %c0_i32 = arith.constant 0 : i32
    %c0_i32_0 = arith.constant 0 : i32
    return %arg0, %arg1, %c0_i32 : i32, i32, i32
  }
}

</mosaic_0001>

<llo_original>
// kernel: tpu_custom_call.1
$region0: #{tpu_custom_call.1}
  #allocation0 [shape = 'u32[]', space=smem, size = 0x4, offset = 0x4, fixed_abs, tag = 'smem constant byte address 0x4 - core index']
  #allocation1 [shape = 'u32[144,128]{1,0:T(1,128)}', space=vmem, size = 0x12000, scoped, tag = 'internal scratch']
  #allocation2 [shape = 'bf16[4,8,8]{2,1,0:T(8,128)(2,1)}', space=vmem, size = 0x2000, scoped, tag = 'scratch operand']
  #allocation3 [shape = 'bf16[4,8,8]{2,1,0:T(8,128)(2,1)}', space=vmem, size = 0x2000, scoped, tag = 'scratch operand']
  %s0 = inlined_call_operand.hbm [shape: f32[2,8,32], index: 0, kind: input, shape index: {}]
  %s1 = inlined_call_operand.hbm [shape: bf16[32,32], index: 1, kind: input, shape index: {}]
  %s2 = inlined_call_operand.vmem [shape: f32[1,32], index: 2, kind: input, shape index: {}]
  %s3 = inlined_call_operand.hbm [shape: bf16[32,64], index: 3, kind: input, shape index: {}]
  %s4 = inlined_call_operand.vmem [shape: f32[1,64], index: 4, kind: input, shape index: {}]
  %s5 = inlined_call_operand.vmem [shape: bf16[4,8,32], index: 5, kind: input, shape index: {}]
  %s6 = inlined_call_operand.hbm [shape: f32[1,32], index: 6, kind: input, shape index: {}]
  %s7 = inlined_call_operand.vmem [shape: f32[8,8], index: 7, kind: input, shape index: {}]
  %s8 = inlined_call_operand.hbm [shape: f32[8,8], index: 8, kind: input, shape index: {}]
  %s9 = inlined_call_operand.vmem [shape: f32[8,8], index: 9, kind: input, shape index: {}]
  %s10 = inlined_call_operand.hbm [shape: f32[2,8,32], index: 10, kind: output, shape index: {}]
  %s11 = sld [smem:[#allocation0]]
  $region97: #{tpu_custom_call.1} parent=0
    _
  %s13 = ssub.s32 1, %s11
  %s14 = scalar_select 0, %s13, %s11
  $region1: #{tpu_custom_call.1} parent=0
    #allocation4 [shape = 'u8[8192]{0}', space=vmem, size = 0x2000, scoped, tag = 'input window, operand 0']
    #allocation5 [shape = 's32[2]{0}', space=sflag, size = 0x8, scoped, tag = 'scoped memory for tpu_custom_call.1']
    #allocation6 [shape = 's32[2]{0}', space=sflag, size = 0x8, scoped, tag = 'scoped memory for tpu_custom_call.1']
    #allocation7 [shape = 'u8[8192]{0}', space=vmem, size = 0x2000, scoped, tag = 'input window, operand 1, single buffered']
    #allocation8 [shape = 's32[1]{0}', space=sflag, size = 0x4, scoped, tag = 'scoped memory for tpu_custom_call.1']
    #allocation9 [shape = 'u8[8192]{0}', space=vmem, size = 0x2000, scoped, tag = 'input window, operand 3, single buffered']
    #allocation10 [shape = 'u8[512]{0}', space=vmem, size = 0x400, scoped, tag = 'input window, operand 6, single buffered']
    #allocation11 [shape = 's32[1]{0}', space=sflag, size = 0x4, scoped, tag = 'scoped memory for tpu_custom_call.1']
    #allocation12 [shape = 'u8[4096]{0}', space=vmem, size = 0x1000, scoped, tag = 'input window, operand 8, single buffered']
    #allocation13 [shape = 'u8[8192]{0}', space=vmem, size = 0x2000, scoped, tag = 'output window, operand 0']
    %15 = vsyncpa [#allocation5], 0
    %s16 = scalar_lea.sflag [#allocation5], 1
    %17 = vsyncpa %s16, 0
    %18 = vsyncpa [#allocation8], 0
    %19 = vsyncpa [#allocation11], 0
    %20 = vsyncpa [#allocation6], 0
    %s21 = scalar_lea.sflag [#allocation6], 1
    %22 = vsyncpa %s21, 0
    loop: start=0, step=1, limit=4
    $region2: #{tpu_custom_call.1} parent=1 // loop_pre_header
      _
    $region3: #{tpu_custom_call.1} parent=1 // loop_header
      %s24 = sphi 0, %s28
      %p25 = scmp.ge.s32.totalorder %s24, 4
      %s31 = sphi 0, %s43
      %s32 = sphi 0, %s39
      %s33 = sphi 0, %s31
      %s34 = sphi 0, %s32
      %s35 = sphi 0, %s33
      %s36 = sphi 0, %s34
      %s46 = sphi 0, %s48
      %s49 = sphi 0, %s46
      %s50 = sphi 0, %s49
      %s66 = sphi 0, %s50
      %s70 = sphi 0, %s70
      %s72 = sphi 0, %s70
      %s73 = sphi 0, %s72
      %s87 = sphi 0, %s73
      %s91 = sphi 0, %s91
      %s93 = sphi 0, %s91
      %s94 = sphi 0, %s93
      %s108 = sphi 0, %s94
      %s112 = sphi 0, %s112
      %s114 = sphi 0, %s112
      %s115 = sphi 0, %s114
      %s129 = sphi 0, %s115
      %s133 = sphi 0, %s133
      %s135 = sphi 0, %s133
      %s136 = sphi 0, %s135
      %s150 = sphi 0, %s136
      %s154 = sphi 0, %s154
      %s156 = sphi 0, %s154
      %s157 = sphi 0, %s156
      %s171 = sphi 0, %s157
      %s175 = sphi 0, %s175
      %s177 = sphi 0, %s175
      %s178 = sphi 0, %s177
      %s192 = sphi 0, %s178
      %s196 = sphi 0, %s196
      %s198 = sphi 0, %s196
      %s199 = sphi 0, %s198
      %s213 = sphi 0, %s199
      %s217 = sphi 0, %s217
      %s219 = sphi 0, %s217
      %s220 = sphi 0, %s219
      %s234 = sphi 0, %s220
      %s240 = sphi 0, %s242
      %s243 = sphi 0, %s240
      %s244 = sphi 0, %s243
      %s260 = sphi 0, %s244
      %s268 = sphi 0, %s270
      %s271 = sphi 0, %s268
      %s272 = sphi 0, %s271
      %s288 = sphi 0, %s272
    $region4: #{tpu_custom_call.1} parent=1 // loop_header_branch
      %27 = sbr.rel (%p25) target = $region8
    $region5: #{tpu_custom_call.1} parent=1 // loop_body
      %s29 = ssub.s32 %s24, 1
      %s30 = ssub.s32 %s24, 2
      %s37 = sadd.s32 1, %s32
      %p38 = scmp.ge.s32.totalorder %s37, 1
      %s39 = scalar_select %p38, 0, %s37
      %s40 = sadd.s32 1, %s31
      %s41 = scalar_select %p38, %s40, %s31
      %p42 = scmp.ge.s32.totalorder %s41, 2
      %s43 = scalar_select %p42, 0, %s41
      %s44 = ssub.s32 %s31, %s43
      %p45 = scmp.eq.s32.totalorder %s44, 0
      %s47 = sadd.s32 %s46, 1
      %s48 = scalar_select %p45, %s46, %s47
      %p51 = pneg %p45
      %p52 = scmp.eq.s32.totalorder %s24, 1
      %p53 = por %p51, %p52
      %p54 = scmp.ne.s32.totalorder %s46, %s49
      %p55 = scmp.eq.s32.totalorder %s24, 0
      %p56 = por %p54, %p55
      %p57 = scmp.ne.s32.totalorder %s46, %s49
      %p58 = scmp.eq.s32.totalorder %s29, 1
      %p59 = por %p57, %p58
      %p60 = scmp.ne.s32.totalorder %s49, %s50
      %p61 = scmp.eq.s32.totalorder %s29, 0
      %p62 = por %p60, %p61
      %p63 = scmp.ne.s32.totalorder %s49, %s50
      %p64 = scmp.eq.s32.totalorder %s30, 1
      %p65 = por %p63, %p64
      %p67 = scmp.ne.s32.totalorder %s50, %s66
      %p68 = scmp.eq.s32.totalorder %s30, 0
      %p69 = por %p67, %p68
      %s71 = sadd.s32 %s70, 1
      %p74 = scmp.eq.s32.totalorder %s24, 1
      %p75 = scmp.ne.s32.totalorder %s70, %s72
      %p76 = scmp.eq.s32.totalorder %s24, 0
      %p77 = por %p75, %p76
      %p78 = scmp.ne.s32.totalorder %s70, %s72
      %p79 = scmp.eq.s32.totalorder %s29, 1
      %p80 = por %p78, %p79
      %p81 = scmp.ne.s32.totalorder %s72, %s73
      %p82 = scmp.eq.s32.totalorder %s29, 0
      %p83 = por %p81, %p82
      %p84 = scmp.ne.s32.totalorder %s72, %s73
      %p85 = scmp.eq.s32.totalorder %s30, 1
      %p86 = por %p84, %p85
      %p88 = scmp.ne.s32.totalorder %s73, %s87
      %p89 = scmp.eq.s32.totalorder %s30, 0
      %p90 = por %p88, %p89
      %s92 = sadd.s32 %s91, 1
      %p95 = scmp.eq.s32.totalorder %s24, 1
      %p96 = scmp.ne.s32.totalorder %s91, %s93
      %p97 = scmp.eq.s32.totalorder %s24, 0
      %p98 = por %p96, %p97
      %p99 = scmp.ne.s32.totalorder %s91, %s93
      %p100 = scmp.eq.s32.totalorder %s29, 1
      %p101 = por %p99, %p100
      %p102 = scmp.ne.s32.totalorder %s93, %s94
      %p103 = scmp.eq.s32.totalorder %s29, 0
      %p104 = por %p102, %p103
      %p105 = scmp.ne.s32.totalorder %s93, %s94
      %p106 = scmp.eq.s32.totalorder %s30, 1
      %p107 = por %p105, %p106
      %p109 = scmp.ne.s32.totalorder %s94, %s108
      %p110 = scmp.eq.s32.totalorder %s30, 0
      %p111 = por %p109, %p110
      %s113 = sadd.s32 %s112, 1
      %p116 = scmp.eq.s32.totalorder %s24, 1
      %p117 = scmp.ne.s32.totalorder %s112, %s114
      %p118 = scmp.eq.s32.totalorder %s24, 0
      %p119 = por %p117, %p118
      %p120 = scmp.ne.s32.totalorder %s112, %s114
      %p121 = scmp.eq.s32.totalorder %s29, 1
      %p122 = por %p120, %p121
      %p123 = scmp.ne.s32.totalorder %s114, %s115
      %p124 = scmp.eq.s32.totalorder %s29, 0
      %p125 = por %p123, %p124
      %p126 = scmp.ne.s32.totalorder %s114, %s115
      %p127 = scmp.eq.s32.totalorder %s30, 1
      %p128 = por %p126, %p127
      %p130 = scmp.ne.s32.totalorder %s115, %s129
      %p131 = scmp.eq.s32.totalorder %s30, 0
      %p132 = por %p130, %p131
      %s134 = sadd.s32 %s133, 1
      %p137 = scmp.eq.s32.totalorder %s24, 1
      %p138 = scmp.ne.s32.totalorder %s133, %s135
      %p139 = scmp.eq.s32.totalorder %s24, 0
      %p140 = por %p138, %p139
      %p141 = scmp.ne.s32.totalorder %s133, %s135
      %p142 = scmp.eq.s32.totalorder %s29, 1
      %p143 = por %p141, %p142
      %p144 = scmp.ne.s32.totalorder %s135, %s136
      %p145 = scmp.eq.s32.totalorder %s29, 0
      %p146 = por %p144, %p145
      %p147 = scmp.ne.s32.totalorder %s135, %s136
      %p148 = scmp.eq.s32.totalorder %s30, 1
      %p149 = por %p147, %p148
      %p151 = scmp.ne.s32.totalorder %s136, %s150
      %p152 = scmp.eq.s32.totalorder %s30, 0
      %p153 = por %p151, %p152
      %s155 = sadd.s32 %s154, 1
      %p158 = scmp.eq.s32.totalorder %s24, 1
      %p159 = scmp.ne.s32.totalorder %s154, %s156
      %p160 = scmp.eq.s32.totalorder %s24, 0
      %p161 = por %p159, %p160
      %p162 = scmp.ne.s32.totalorder %s154, %s156
      %p163 = scmp.eq.s32.totalorder %s29, 1
      %p164 = por %p162, %p163
      %p165 = scmp.ne.s32.totalorder %s156, %s157
      %p166 = scmp.eq.s32.totalorder %s29, 0
      %p167 = por %p165, %p166
      %p168 = scmp.ne.s32.totalorder %s156, %s157
      %p169 = scmp.eq.s32.totalorder %s30, 1
      %p170 = por %p168, %p169
      %p172 = scmp.ne.s32.totalorder %s157, %s171
      %p173 = scmp.eq.s32.totalorder %s30, 0
      %p174 = por %p172, %p173
      %s176 = sadd.s32 %s175, 1
      %p179 = scmp.eq.s32.totalorder %s24, 1
      %p180 = scmp.ne.s32.totalorder %s175, %s177
      %p181 = scmp.eq.s32.totalorder %s24, 0
      %p182 = por %p180, %p181
      %p183 = scmp.ne.s32.totalorder %s175, %s177
      %p184 = scmp.eq.s32.totalorder %s29, 1
      %p185 = por %p183, %p184
      %p186 = scmp.ne.s32.totalorder %s177, %s178
      %p187 = scmp.eq.s32.totalorder %s29, 0
      %p188 = por %p186, %p187
      %p189 = scmp.ne.s32.totalorder %s177, %s178
      %p190 = scmp.eq.s32.totalorder %s30, 1
      %p191 = por %p189, %p190
      %p193 = scmp.ne.s32.totalorder %s178, %s192
      %p194 = scmp.eq.s32.totalorder %s30, 0
      %p195 = por %p193, %p194
      %s197 = sadd.s32 %s196, 1
      %p200 = scmp.eq.s32.totalorder %s24, 1
      %p201 = scmp.ne.s32.totalorder %s196, %s198
      %p202 = scmp.eq.s32.totalorder %s24, 0
      %p203 = por %p201, %p202
      %p204 = scmp.ne.s32.totalorder %s196, %s198
      %p205 = scmp.eq.s32.totalorder %s29, 1
      %p206 = por %p204, %p205
      %p207 = scmp.ne.s32.totalorder %s198, %s199
      %p208 = scmp.eq.s32.totalorder %s29, 0
      %p209 = por %p207, %p208
      %p210 = scmp.ne.s32.totalorder %s198, %s199
      %p211 = scmp.eq.s32.totalorder %s30, 1
      %p212 = por %p210, %p211
      %p214 = scmp.ne.s32.totalorder %s199, %s213
      %p215 = scmp.eq.s32.totalorder %s30, 0
      %p216 = por %p214, %p215
      %s218 = sadd.s32 %s217, 1
      %p221 = scmp.eq.s32.totalorder %s24, 1
      %p222 = scmp.ne.s32.totalorder %s217, %s219
      %p223 = scmp.eq.s32.totalorder %s24, 0
      %p224 = por %p222, %p223
      %p225 = scmp.ne.s32.totalorder %s217, %s219
      %p226 = scmp.eq.s32.totalorder %s29, 1
      %p227 = por %p225, %p226
      %p228 = scmp.ne.s32.totalorder %s219, %s220
      %p229 = scmp.eq.s32.totalorder %s29, 0
      %p230 = por %p228, %p229
      %p231 = scmp.ne.s32.totalorder %s219, %s220
      %p232 = scmp.eq.s32.totalorder %s30, 1
      %p233 = por %p231, %p232
      %p235 = scmp.ne.s32.totalorder %s220, %s234
      %p236 = scmp.eq.s32.totalorder %s30, 0
      %p237 = por %p235, %p236
      %s238 = ssub.s32 %s32, %s39
      %p239 = scmp.eq.s32.totalorder %s238, 0
      %s241 = sadd.s32 %s240, 1
      %s242 = scalar_select %p239, %s240, %s241
      %p245 = pneg %p239
      %p246 = scmp.eq.s32.totalorder %s24, 1
      %p247 = por %p245, %p246
      %p248 = scmp.ne.s32.totalorder %s240, %s243
      %p249 = scmp.eq.s32.totalorder %s24, 0
      %p250 = por %p248, %p249
      %p251 = scmp.ne.s32.totalorder %s240, %s243
      %p252 = scmp.eq.s32.totalorder %s29, 1
      %p253 = por %p251, %p252
      %p254 = scmp.ne.s32.totalorder %s243, %s244
      %p255 = scmp.eq.s32.totalorder %s29, 0
      %p256 = por %p254, %p255
      %p257 = scmp.ne.s32.totalorder %s243, %s244
      %p258 = scmp.eq.s32.totalorder %s30, 1
      %p259 = por %p257, %p258
      %p261 = scmp.ne.s32.totalorder %s244, %s260
      %p262 = scmp.eq.s32.totalorder %s30, 0
      %p263 = por %p261, %p262
      %s264 = ssub.s32 %s31, %s43
      %s265 = ssub.s32 %s32, %s39
      %s266 = sor.u32 %s264, %s265
      %p267 = scmp.eq.s32.totalorder %s266, 0
      %s269 = sadd.s32 %s268, 1
      %s270 = scalar_select %p267, %s268, %s269
      %p273 = pneg %p267
      %p274 = scmp.eq.s32.totalorder %s24, 1
      %p275 = por %p273, %p274
      %p276 = scmp.ne.s32.totalorder %s268, %s271
      %p277 = scmp.eq.s32.totalorder %s24, 0
      %p278 = por %p276, %p277
      %p279 = scmp.ne.s32.totalorder %s268, %s271
      %p280 = scmp.eq.s32.totalorder %s29, 1
      %p281 = por %p279, %p280
      %p282 = scmp.ne.s32.totalorder %s271, %s272
      %p283 = scmp.eq.s32.totalorder %s29, 0
      %p284 = por %p282, %p283
      %p285 = scmp.ne.s32.totalorder %s271, %s272
      %p286 = scmp.eq.s32.totalorder %s30, 1
      %p287 = por %p285, %p286
      %p289 = scmp.ne.s32.totalorder %s272, %s288
      %p290 = scmp.eq.s32.totalorder %s30, 0
      %p291 = por %p289, %p290
      %p292 = scmp.le.s32.totalorder 1, %s24
      %p293 = scmp.lt.s32.totalorder %s24, 3
      %p294 = pnand %p292, %p293
      %p295 = pneg %p294
      // Predicated region
      $region9: #{tpu_custom_call.1} parent=5 // pred_check
        _
      $region10: #{tpu_custom_call.1} parent=5 // pred_check_branch
        %297 = sbr.rel (%p294) target = $region12
      $region11: #{tpu_custom_call.1} parent=5 // pred_region
        %s298 = ssub.s32 %s24, 1
        // Predicated region
        $region13: #{tpu_custom_call.1} parent=11 // pred_check
          %p299 = pneg %p83
        $region14: #{tpu_custom_call.1} parent=11 // pred_check_branch
          %301 = sbr.rel (%p299) target = $region16
        $region15: #{tpu_custom_call.1} parent=11 // pred_region
          %s303 = ssub.s32 256, 256
          %304 = vsyncadd [#allocation8], %s303
          %s305 = sshll.u32 [#allocation7], 4
          %s306 = int_to_ptr.vmem [resolvable:$true] %s305
          %311 = dma.hbm_to_vmem [thread:$0]  %s1, 256, %s306, [#allocation8], 64, 64, 4
        $region16: #{tpu_custom_call.1} parent=11 // pred_fallthru
          _
        // Predicated region
        $region17: #{tpu_custom_call.1} parent=11 // pred_check
          %p312 = pneg %p104
        $region18: #{tpu_custom_call.1} parent=11 // pred_check_branch
          %314 = sbr.rel (%p312) target = $region20
        $region19: #{tpu_custom_call.1} parent=11 // pred_region
          _
        $region20: #{tpu_custom_call.1} parent=11 // pred_fallthru
          _
        // Predicated region
        $region21: #{tpu_custom_call.1} parent=11 // pred_check
          %p315 = pneg %p125
        $region22: #{tpu_custom_call.1} parent=11 // pred_check_branch
          %317 = sbr.rel (%p315) target = $region24
        $region23: #{tpu_custom_call.1} parent=11 // pred_region
          %s319 = ssub.s32 256, 256
          %320 = vsyncadd [#allocation8], %s319
          %s321 = sshll.u32 [#allocation9], 4
          %s322 = int_to_ptr.vmem [resolvable:$true] %s321
          %327 = dma.hbm_to_vmem [thread:$0]  %s3, 256, %s322, [#allocation8], 64, 64, 4
        $region24: #{tpu_custom_call.1} parent=11 // pred_fallthru
          _
        // Predicated region
        $region25: #{tpu_custom_call.1} parent=11 // pred_check
          %p328 = pneg %p146
        $region26: #{tpu_custom_call.1} parent=11 // pred_check_branch
          %330 = sbr.rel (%p328) target = $region28
        $region27: #{tpu_custom_call.1} parent=11 // pred_region
          _
        $region28: #{tpu_custom_call.1} parent=11 // pred_fallthru
          _
        // Predicated region
        $region29: #{tpu_custom_call.1} parent=11 // pred_check
          %p331 = pneg %p167
        $region30: #{tpu_custom_call.1} parent=11 // pred_check_branch
          %333 = sbr.rel (%p331) target = $region32
        $region31: #{tpu_custom_call.1} parent=11 // pred_region
          _
        $region32: #{tpu_custom_call.1} parent=11 // pred_fallthru
          _
        // Predicated region
        $region33: #{tpu_custom_call.1} parent=11 // pred_check
          %p334 = pneg %p188
        $region34: #{tpu_custom_call.1} parent=11 // pred_check_branch
          %336 = sbr.rel (%p334) target = $region36
        $region35: #{tpu_custom_call.1} parent=11 // pred_region
          %s338 = ssub.s32 16, 16
          %339 = vsyncadd [#allocation11], %s338
          %s341 = sshll.u32 [#allocation10], 4
          %s342 = int_to_ptr.vmem [resolvable:$true] %s341
          %344 = dma.hbm_to_vmem [thread:$0]  %s6, 16, %s342, [#allocation11]
        $region36: #{tpu_custom_call.1} parent=11 // pred_fallthru
          _
        // Predicated region
        $region37: #{tpu_custom_call.1} parent=11 // pred_check
          %p345 = pneg %p209
        $region38: #{tpu_custom_call.1} parent=11 // pred_check_branch
          %347 = sbr.rel (%p345) target = $region40
        $region39: #{tpu_custom_call.1} parent=11 // pred_region
          _
        $region40: #{tpu_custom_call.1} parent=11 // pred_fallthru
          _
        // Predicated region
        $region41: #{tpu_custom_call.1} parent=11 // pred_check
          %p348 = pneg %p230
        $region42: #{tpu_custom_call.1} parent=11 // pred_check_branch
          %350 = sbr.rel (%p348) target = $region44
        $region43: #{tpu_custom_call.1} parent=11 // pred_region
          %s352 = ssub.s32 128, 128
          %353 = vsyncadd [#allocation11], %s352
          %s355 = sshll.u32 [#allocation12], 4
          %s356 = int_to_ptr.vmem [resolvable:$true] %s355
          %358 = dma.hbm_to_vmem [thread:$0]  %s8, 128, %s356, [#allocation11]
        $region44: #{tpu_custom_call.1} parent=11 // pred_fallthru
          _
        // Predicated region
        $region45: #{tpu_custom_call.1} parent=11 // pred_check
          %p359 = pneg %p256
        $region46: #{tpu_custom_call.1} parent=11 // pred_check_branch
          %361 = sbr.rel (%p359) target = $region48
        $region47: #{tpu_custom_call.1} parent=11 // pred_region
          %p362 = scmp.lt.s32.totalorder %s34, 0
          %s363 = scalar_select %p362, %s34, 0
          %s364 = smul.addr %s363, 8
          %s365 = scalar_lea.vmem %s9, %s364
        $region48: #{tpu_custom_call.1} parent=11 // pred_fallthru
          _
      $region12: #{tpu_custom_call.1} parent=5 // pred_fallthru
        _
      %p366 = scmp.lt.s32.totalorder %s24, 2
      // Predicated region
      $region49: #{tpu_custom_call.1} parent=5 // pred_check
        %p367 = pneg %p366
      $region50: #{tpu_custom_call.1} parent=5 // pred_check_branch
        %369 = sbr.rel (%p367) target = $region52
      $region51: #{tpu_custom_call.1} parent=5 // pred_region
        // Predicated region
        $region53: #{tpu_custom_call.1} parent=51 // pred_check
          %p370 = pneg %p56
        $region54: #{tpu_custom_call.1} parent=51 // pred_check_branch
          %372 = sbr.rel (%p370) target = $region56
        $region55: #{tpu_custom_call.1} parent=51 // pred_region
          %s373 = sand.u32 %s46, 1
          %s374 = scalar_lea.sflag [#allocation5], %s373
          %s375 = sand.u32 %s46, 1
          %s376 = smul.addr %s375, 8
          %s377 = scalar_lea.vmem [#allocation4], %s376
          %s379 = ssub.s32 128, 128
          %380 = vsyncadd %s374, %s379
          %s381 = smul.addr %s31, 128
          %s382 = scalar_lea.hbm %s0, %s381
          %s384 = sshll.u32 %s377, 4
          %s385 = int_to_ptr.vmem [resolvable:$true] %s384
          %387 = dma.hbm_to_vmem [thread:$0]  %s382, 128, %s385, %s374
        $region56: #{tpu_custom_call.1} parent=51 // pred_fallthru
          _
      $region52: #{tpu_custom_call.1} parent=5 // pred_fallthru
        _
      %p388 = scmp.le.s32.totalorder 1, %s24
      %p389 = scmp.lt.s32.totalorder %s24, 3
      %p390 = pnand %p388, %p389
      %p391 = pneg %p390
      // Predicated region
      $region57: #{tpu_custom_call.1} parent=5 // pred_check
        _
      $region58: #{tpu_custom_call.1} parent=5 // pred_check_branch
        %393 = sbr.rel (%p390) target = $region60
      $region59: #{tpu_custom_call.1} parent=5 // pred_region
        %s394 = ssub.s32 %s24, 1
        %s395 = sand.u32 %s49, 1
        %s396 = scalar_lea.sflag [#allocation5], %s395
        %s397 = sand.u32 %s49, 1
        %s398 = smul.addr %s397, 8
        %s399 = scalar_lea.vmem [#allocation4], %s398
        // Predicated region
        $region61: #{tpu_custom_call.1} parent=59 // pred_check
          %p400 = pneg %p62
        $region62: #{tpu_custom_call.1} parent=59 // pred_check_branch
          %402 = sbr.rel (%p400) target = $region64
        $region63: #{tpu_custom_call.1} parent=59 // pred_region
          %403 = dma.done %s396, 128
        $region64: #{tpu_custom_call.1} parent=59 // pred_fallthru
          _
        // Predicated region
        $region65: #{tpu_custom_call.1} parent=59 // pred_check
          %p404 = pneg %p83
        $region66: #{tpu_custom_call.1} parent=59 // pred_check_branch
          %406 = sbr.rel (%p404) target = $region68
        $region67: #{tpu_custom_call.1} parent=59 // pred_region
          %407 = dma.done [#allocation8], 256
        $region68: #{tpu_custom_call.1} parent=59 // pred_fallthru
          _
        // Predicated region
        $region69: #{tpu_custom_call.1} parent=59 // pred_check
          %p408 = pneg %p125
        $region70: #{tpu_custom_call.1} parent=59 // pred_check_branch
          %410 = sbr.rel (%p408) target = $region72
        $region71: #{tpu_custom_call.1} parent=59 // pred_region
          %411 = dma.done [#allocation8], 256
        $region72: #{tpu_custom_call.1} parent=59 // pred_fallthru
          _
        // Predicated region
        $region73: #{tpu_custom_call.1} parent=59 // pred_check
          %p412 = pneg %p188
        $region74: #{tpu_custom_call.1} parent=59 // pred_check_branch
          %414 = sbr.rel (%p412) target = $region76
        $region75: #{tpu_custom_call.1} parent=59 // pred_region
          %415 = dma.done [#allocation11], 16
        $region76: #{tpu_custom_call.1} parent=59 // pred_fallthru
          _
        // Predicated region
        $region77: #{tpu_custom_call.1} parent=59 // pred_check
          %p416 = pneg %p230
        $region78: #{tpu_custom_call.1} parent=59 // pred_check_branch
          %418 = sbr.rel (%p416) target = $region80
        $region79: #{tpu_custom_call.1} parent=59 // pred_region
          %419 = dma.done [#allocation11], 128
        $region80: #{tpu_custom_call.1} parent=59 // pred_fallthru
          _
        %s420 = sand.u32 %s49, 1
        %s421 = scalar_lea.sflag [#allocation5], %s420
        %s422 = sand.u32 %s49, 1
        %s423 = smul.addr %s422, 8
        %s424 = scalar_lea.vmem [#allocation4], %s423
        %p425 = pneg %p62
        %p426 = pneg %p59
        %p427 = pneg %p83
        %p428 = pneg %p80
        %p429 = pneg %p104
        %p430 = pneg %p101
        %p431 = pneg %p125
        %p432 = pneg %p122
        %p433 = pneg %p146
        %p434 = pneg %p143
        %p435 = pneg %p167
        %p436 = pneg %p164
        %p437 = pneg %p188
        %p438 = pneg %p185
        %p439 = pneg %p209
        %p440 = pneg %p206
        %p441 = pneg %p230
        %p442 = pneg %p227
        %p443 = scmp.lt.s32.totalorder %s34, 0
        %s444 = scalar_select %p443, %s34, 0
        %s445 = smul.addr %s444, 8
        %s446 = scalar_lea.vmem %s9, %s445
        %p447 = pneg %p256
        %p448 = pneg %p253
        %p449 = pneg %p284
        %p450 = pneg %p281
        %s451 = sand.u32 %s271, 1
        %s452 = scalar_lea.sflag [#allocation6], %s451
        %s453 = sand.u32 %s271, 1
        %s454 = smul.addr %s453, 8
        %s455 = scalar_lea.vmem [#allocation13], %s454
        %p456 = scmp.lt.s32.totalorder %s34, 0
        %s457 = scalar_select %p456, %s34, 0
        %s458 = smul.addr %s457, 8
        %s459 = scalar_lea.vmem %s9, %s458
        %s461 = smul.u32 %s34, 8
        %p462 = scmp.eq.s32.totalorder %s34, 0
        // Predicated region
        $region81: #{tpu_custom_call.1} parent=59 // pred_check
          %p463 = pneg %p462
        $region82: #{tpu_custom_call.1} parent=59 // pred_check_branch
          %465 = sbr.rel (%p463) target = $region84
        $region83: #{tpu_custom_call.1} parent=59 // pred_region
          %v466 = vld [vmem:[%s399] sm:$0xff]
          %v467 = vpack.c.bf16 %v466, %v466
          %v468 = vld [vmem:[#allocation9] sm:$0xf]
          %v469 = vld [vmem:[#allocation9 + $0x4] sm:$0xf]
          %v470 = vld [vmem:[#allocation9 + $0x8] sm:$0xf]
          %v471 = vld [vmem:[#allocation9 + $0xc] sm:$0xf]
          %v472 = vld [vmem:[%s4] sm:$0x1]
          %v474 = vlaneseq
          %v475 = vshrl.u32 %v474, 7
          %v476 = vsub.s32 0, %v475
          %v477 = vrot.slane %v472, %v476
          %v483 = vunpack.c.l.b16 %v468
          %v484 = vunpack.c.l.b16 %v469
          %v485 = vunpack.c.l.b16 %v470
          %v486 = vunpack.c.l.b16 %v471
          %v487 = vpack.c.b16 %v484, %v483
          %v488 = vpack.c.b16 %v486, %v485
          %vm491 = vcmask 261120
          %v493 = vsel %vm491, %v467, 0
          %495 = vmatprep.subr.bf16.mxu0 0
          %496 = vmatpush1.bf16.msra.mxu0 %v487
          %497 = vmatprep.subr.bf16.mxu0 0
          %498 = vmatpush1.bf16.msra.mxu0 %v488
          %499 = vmatprep.subr.bf16.mxu0 0
          %500 = vmatpush1.bf16.msra.mxu0 0
          %501 = vmatprep.subr.bf16.mxu0 0
          %502 = vmatpush1.bf16.msra.mxu0 0
          %503 = vmatprep.subr.bf16.mxu0 0
          %504 = vmatpush1.bf16.msra.mxu0 0
          %505 = vmatprep.subr.bf16.mxu0 0
          %506 = vmatpush1.bf16.msra.mxu0 0
          %507 = vmatprep.subr.bf16.mxu0 0
          %508 = vmatpush1.bf16.msra.mxu0 0
          %509 = vmatprep.subr.bf16.mxu0 0
          %510 = vmatpush1.bf16.msra.mxu0 0
          %511 = vmatprep.subr.bf16.mxu0 0
          %512 = vmatpush1.bf16.msra.mxu0 0
          %513 = vmatprep.subr.bf16.mxu0 0
          %514 = vmatpush1.bf16.msra.mxu0 0
          %515 = vmatprep.subr.bf16.mxu0 0
          %516 = vmatpush1.bf16.msra.mxu0 0
          %517 = vmatprep.subr.bf16.mxu0 0
          %518 = vmatpush1.bf16.msra.mxu0 0
          %519 = vmatprep.subr.bf16.mxu0 0
          %520 = vmatpush1.bf16.msra.mxu0 0
          %521 = vmatprep.subr.bf16.mxu0 0
          %522 = vmatpush1.bf16.msra.mxu0 0
          %523 = vmatprep.subr.bf16.mxu0 0
          %524 = vmatpush1.bf16.msra.mxu0 0
          %525 = vmatprep.subr.bf16.mxu0 0
          %526 = vmatpush1.bf16.msra.mxu0 0
          %527 = vmatprep.mubr.bf16.mxu0 0
          %528 = vmatmul.mubr.bf16.gmra.mrb[0].mxu0 %v493
          %v529 = vpop.f32.mrb[0].mxu0
          %v530 = vadd.f32 %v477, %v529
          %v531 = vpop.f32.mrb[0].mxu0
          %v532 = vpop.f32.mrb[0].mxu0
          %v533 = vpop.f32.mrb[0].mxu0
          %534 = vdwg.mxu0
          %536 = vrot.lane.b32.xlu0 %v530, 120
          %v537 = vpop.permute.xlu0 %536
          %539 = vrot.lane.b32.xlu0 %v530, 112
          %v540 = vpop.permute.xlu0 %539
          %542 = vrot.lane.b32.xlu0 %v530, 104
          %v543 = vpop.permute.xlu0 %542
          %v545 = vcombine.low %v530, %v540
          %v546 = vcombine.high %v530, %v540
          %v548 = vunpack.c.l.s4 1983009808
          %v549 = vunpack.c.0.s8 %v548
          %v550 = vlaneseq
          %v551 = vshrl.u32 %v550, 7
          %v552 = vsub.s32 %v549, %v551
          %v553 = vrot.slane %v545, %v552
          %v555 = vunpack.c.l.s4 1983009808
          %v556 = vunpack.c.0.s8 %v555
          %v557 = vlaneseq
          %v558 = vshrl.u32 %v557, 7
          %v559 = vsub.s32 %v556, %v558
          %v560 = vrot.slane %v546, %v559
          %v561 = vcombine.low %v537, %v543
          %v562 = vcombine.high %v537, %v543
          %v564 = vunpack.c.l.s4 1983009808
          %v565 = vunpack.c.0.s8 %v564
          %v566 = vlaneseq
          %v567 = vshrl.u32 %v566, 7
          %v568 = vsub.s32 %v565, %v567
          %v569 = vrot.slane %v561, %v568
          %v571 = vunpack.c.l.s4 1983009808
          %v572 = vunpack.c.0.s8 %v571
          %v573 = vlaneseq
          %v574 = vshrl.u32 %v573, 7
          %v575 = vsub.s32 %v572, %v574
          %v576 = vrot.slane %v562, %v575
          %v577 = vcombine.low %v553, %v569
          %v578 = vcombine.high %v553, %v569
          %v580 = vunpack.c.l.s4 1934713408
          %v581 = vunpack.c.0.s8 %v580
          %v582 = vlaneseq
          %v583 = vshrl.u32 %v582, 7
          %v584 = vsub.s32 %v581, %v583
          %v585 = vrot.slane %v577, %v584
          %v587 = vunpack.c.l.s4 1934713408
          %v588 = vunpack.c.0.s8 %v587
          %v589 = vlaneseq
          %v590 = vshrl.u32 %v589, 7
          %v591 = vsub.s32 %v588, %v590
          %v592 = vrot.slane %v578, %v591
          %v593 = vcombine.low %v560, %v576
          %v594 = vcombine.high %v560, %v576
          %v596 = vunpack.c.l.s4 1934713408
          %v597 = vunpack.c.0.s8 %v596
          %v598 = vlaneseq
          %v599 = vshrl.u32 %v598, 7
          %v600 = vsub.s32 %v597, %v599
          %v601 = vrot.slane %v593, %v600
          %v603 = vunpack.c.l.s4 1934713408
          %v604 = vunpack.c.0.s8 %v603
          %v605 = vlaneseq
          %v606 = vshrl.u32 %v605, 7
          %v607 = vsub.s32 %v604, %v606
          %v608 = vrot.slane %v594, %v607
          %v609 = vcombine.high %v585, 0.0
          %v610 = vcombine.high %v592, 0.0
          %v611 = vcombine.high %v601, 0.0
          %v612 = vcombine.high %v608, 0.0
          %v613 = vcombine.low %v585, %v592
          %v615 = vunpack.c.l.s4 1983009808
          %v616 = vunpack.c.0.s8 %v615
          %v617 = vlaneseq
          %v618 = vshrl.u32 %v617, 7
          %v619 = vsub.s32 %v616, %v618
          %v620 = vrot.slane %v613, %v619
          %v621 = vcombine.low %v609, %v610
          %v623 = vunpack.c.l.s4 1983009808
          %v624 = vunpack.c.0.s8 %v623
          %v625 = vlaneseq
          %v626 = vshrl.u32 %v625, 7
          %v627 = vsub.s32 %v624, %v626
          %v628 = vrot.slane %v621, %v627
          %v629 = vcombine.low %v601, %v608
          %v631 = vunpack.c.l.s4 1983009808
          %v632 = vunpack.c.0.s8 %v631
          %v633 = vlaneseq
          %v634 = vshrl.u32 %v633, 7
          %v635 = vsub.s32 %v632, %v634
          %v636 = vrot.slane %v629, %v635
          %v637 = vcombine.low %v611, %v612
          %v639 = vunpack.c.l.s4 1983009808
          %v640 = vunpack.c.0.s8 %v639
          %v641 = vlaneseq
          %v642 = vshrl.u32 %v641, 7
          %v643 = vsub.s32 %v640, %v642
          %v644 = vrot.slane %v637, %v643
          %v645 = vcombine.low %v620, %v628
          %v646 = vcombine.high %v620, %v628
          %v648 = vunpack.c.l.s4 1934713408
          %v649 = vunpack.c.0.s8 %v648
          %v650 = vlaneseq
          %v651 = vshrl.u32 %v650, 7
          %v652 = vsub.s32 %v649, %v651
          %v653 = vrot.slane %v645, %v652
          %v655 = vunpack.c.l.s4 1934713408
          %v656 = vunpack.c.0.s8 %v655
          %v657 = vlaneseq
          %v658 = vshrl.u32 %v657, 7
          %v659 = vsub.s32 %v656, %v658
          %v660 = vrot.slane %v646, %v659
          %v661 = vcombine.low %v636, %v644
          %v662 = vcombine.high %v636, %v644
          %v664 = vunpack.c.l.s4 1934713408
          %v665 = vunpack.c.0.s8 %v664
          %v666 = vlaneseq
          %v667 = vshrl.u32 %v666, 7
          %v668 = vsub.s32 %v665, %v667
          %v669 = vrot.slane %v661, %v668
          %v671 = vunpack.c.l.s4 1934713408
          %v672 = vunpack.c.0.s8 %v671
          %v673 = vlaneseq
          %v674 = vshrl.u32 %v673, 7
          %v675 = vsub.s32 %v672, %v674
          %v676 = vrot.slane %v662, %v675
          %v677 = vcombine.low %v653, %v669
          %v678 = vcombine.high %v653, %v669
          %v679 = vcombine.low %v660, %v676
          %v680 = vcombine.high %v660, %v676
          %681 = vrot.lane.b32.xlu0 %v530, 96
          %v682 = vpop.permute.xlu0 %681
          %683 = vrot.lane.b32.xlu0 %v537, 96
          %v684 = vpop.permute.xlu0 %683
          %685 = vrot.lane.b32.xlu0 %v540, 96
          %v686 = vpop.permute.xlu0 %685
          %687 = vrot.lane.b32.xlu0 %v543, 96
          %v688 = vpop.permute.xlu0 %687
          %v693 = vcombine.low %v682, %v686
          %v694 = vcombine.high %v682, %v686
          %v696 = vunpack.c.l.s4 1983009808
          %v697 = vunpack.c.0.s8 %v696
          %v698 = vlaneseq
          %v699 = vshrl.u32 %v698, 7
          %v700 = vsub.s32 %v697, %v699
          %v701 = vrot.slane %v693, %v700
          %v703 = vunpack.c.l.s4 1983009808
          %v704 = vunpack.c.0.s8 %v703
          %v705 = vlaneseq
          %v706 = vshrl.u32 %v705, 7
          %v707 = vsub.s32 %v704, %v706
          %v708 = vrot.slane %v694, %v707
          %v709 = vcombine.low %v684, %v688
          %v710 = vcombine.high %v684, %v688
          %v712 = vunpack.c.l.s4 1983009808
          %v713 = vunpack.c.0.s8 %v712
          %v714 = vlaneseq
          %v715 = vshrl.u32 %v714, 7
          %v716 = vsub.s32 %v713, %v715
          %v717 = vrot.slane %v709, %v716
          %v719 = vunpack.c.l.s4 1983009808
          %v720 = vunpack.c.0.s8 %v719
          %v721 = vlaneseq
          %v722 = vshrl.u32 %v721, 7
          %v723 = vsub.s32 %v720, %v722
          %v724 = vrot.slane %v710, %v723
          %v725 = vcombine.low %v701, %v717
          %v726 = vcombine.high %v701, %v717
          %v728 = vunpack.c.l.s4 1934713408
          %v729 = vunpack.c.0.s8 %v728
          %v730 = vlaneseq
          %v731 = vshrl.u32 %v730, 7
          %v732 = vsub.s32 %v729, %v731
          %v733 = vrot.slane %v725, %v732
          %v735 = vunpack.c.l.s4 1934713408
          %v736 = vunpack.c.0.s8 %v735
          %v737 = vlaneseq
          %v738 = vshrl.u32 %v737, 7
          %v739 = vsub.s32 %v736, %v738
          %v740 = vrot.slane %v726, %v739
          %v741 = vcombine.low %v708, %v724
          %v742 = vcombine.high %v708, %v724
          %v744 = vunpack.c.l.s4 1934713408
          %v745 = vunpack.c.0.s8 %v744
          %v746 = vlaneseq
          %v747 = vshrl.u32 %v746, 7
          %v748 = vsub.s32 %v745, %v747
          %v749 = vrot.slane %v741, %v748
          %v751 = vunpack.c.l.s4 1934713408
          %v752 = vunpack.c.0.s8 %v751
          %v753 = vlaneseq
          %v754 = vshrl.u32 %v753, 7
          %v755 = vsub.s32 %v752, %v754
          %v756 = vrot.slane %v742, %v755
          %v757 = vcombine.high %v733, 0.0
          %v758 = vcombine.high %v740, 0.0
          %v759 = vcombine.high %v749, 0.0
          %v760 = vcombine.high %v756, 0.0
          %v761 = vcombine.low %v733, %v740
          %v763 = vunpack.c.l.s4 1983009808
          %v764 = vunpack.c.0.s8 %v763
          %v765 = vlaneseq
          %v766 = vshrl.u32 %v765, 7
          %v767 = vsub.s32 %v764, %v766
          %v768 = vrot.slane %v761, %v767
          %v769 = vcombine.low %v757, %v758
          %v771 = vunpack.c.l.s4 1983009808
          %v772 = vunpack.c.0.s8 %v771
          %v773 = vlaneseq
          %v774 = vshrl.u32 %v773, 7
          %v775 = vsub.s32 %v772, %v774
          %v776 = vrot.slane %v769, %v775
          %v777 = vcombine.low %v749, %v756
          %v779 = vunpack.c.l.s4 1983009808
          %v780 = vunpack.c.0.s8 %v779
          %v781 = vlaneseq
          %v782 = vshrl.u32 %v781, 7
          %v783 = vsub.s32 %v780, %v782
          %v784 = vrot.slane %v777, %v783
          %v785 = vcombine.low %v759, %v760
          %v787 = vunpack.c.l.s4 1983009808
          %v788 = vunpack.c.0.s8 %v787
          %v789 = vlaneseq
          %v790 = vshrl.u32 %v789, 7
          %v791 = vsub.s32 %v788, %v790
          %v792 = vrot.slane %v785, %v791
          %v793 = vcombine.low %v768, %v776
          %v794 = vcombine.high %v768, %v776
          %v796 = vunpack.c.l.s4 1934713408
          %v797 = vunpack.c.0.s8 %v796
          %v798 = vlaneseq
          %v799 = vshrl.u32 %v798, 7
          %v800 = vsub.s32 %v797, %v799
          %v801 = vrot.slane %v793, %v800
          %v803 = vunpack.c.l.s4 1934713408
          %v804 = vunpack.c.0.s8 %v803
          %v805 = vlaneseq
          %v806 = vshrl.u32 %v805, 7
          %v807 = vsub.s32 %v804, %v806
          %v808 = vrot.slane %v794, %v807
          %v809 = vcombine.low %v784, %v792
          %v810 = vcombine.high %v784, %v792
          %v812 = vunpack.c.l.s4 1934713408
          %v813 = vunpack.c.0.s8 %v812
          %v814 = vlaneseq
          %v815 = vshrl.u32 %v814, 7
          %v816 = vsub.s32 %v813, %v815
          %v817 = vrot.slane %v809, %v816
          %v819 = vunpack.c.l.s4 1934713408
          %v820 = vunpack.c.0.s8 %v819
          %v821 = vlaneseq
          %v822 = vshrl.u32 %v821, 7
          %v823 = vsub.s32 %v820, %v822
          %v824 = vrot.slane %v810, %v823
          %v825 = vcombine.low %v801, %v817
          %v826 = vcombine.high %v801, %v817
          %v827 = vcombine.low %v808, %v824
          %v828 = vcombine.high %v808, %v824
          %v829 = vld [vmem:[%s7] sm:$0xff]
          %v830 = vmul.f32 %v677, %v829
          %v831 = vmul.f32 %v678, %v829
          %v832 = vmul.f32 %v679, %v829
          %v833 = vmul.f32 %v680, %v829
          %838 = vrot.lane.b32.xlu0 %v677, 124
          %v839 = vpop.permute.xlu0 %838
          %840 = vrot.lane.b32.xlu0 %v678, 124
          %v841 = vpop.permute.xlu0 %840
          %842 = vrot.lane.b32.xlu0 %v679, 124
          %v843 = vpop.permute.xlu0 %842
          %844 = vrot.lane.b32.xlu0 %v680, 124
          %v845 = vpop.permute.xlu0 %844
          %850 = vrot.lane.b32.xlu0 %v677, 4
          %v851 = vpop.permute.xlu0 %850
          %852 = vrot.lane.b32.xlu0 %v678, 4
          %v853 = vpop.permute.xlu0 %852
          %854 = vrot.lane.b32.xlu0 %v679, 4
          %v855 = vpop.permute.xlu0 %854
          %856 = vrot.lane.b32.xlu0 %v680, 4
          %v857 = vpop.permute.xlu0 %856
          %vm862 = vcmask 31744
          %v863 = vsel %vm862, %v839, %v851
          %v864 = vsel %vm862, %v841, %v853
          %v865 = vsel %vm862, %v843, %v855
          %v866 = vsel %vm862, %v845, %v857
          %v867 = vld [vmem:[#allocation12] sm:$0xff]
          %v868 = vmul.f32 %v863, %v867
          %v869 = vmul.f32 %v864, %v867
          %v870 = vmul.f32 %v865, %v867
          %v871 = vmul.f32 %v866, %v867
          %v872 = vadd.f32 %v830, %v868
          %v873 = vadd.f32 %v831, %v869
          %v874 = vadd.f32 %v832, %v870
          %v875 = vadd.f32 %v833, %v871
          %v876 = vpack.c.bf16 %v872, %v872
          %v877 = vpack.c.bf16 %v873, %v873
          %v878 = vpack.c.bf16 %v874, %v874
          %v879 = vpack.c.bf16 %v875, %v875
          %vm880 = vcmask 60416
          %881 = vst.msk [vmem:[#allocation2] sm:$0xf] %vm880, %v876
          %882 = vst.msk [vmem:[#allocation2 + $0x4] sm:$0xf] %vm880, %v877
          %883 = vst.msk [vmem:[#allocation2 + $0x8] sm:$0xf] %vm880, %v878
          %884 = vst.msk [vmem:[#allocation2 + $0xc] sm:$0xf] %vm880, %v879
          %v885 = vpack.c.bf16 %v825, %v825
          %v886 = vpack.c.bf16 %v826, %v826
          %v887 = vpack.c.bf16 %v827, %v827
          %v888 = vpack.c.bf16 %v828, %v828
          %889 = vst.msk [vmem:[#allocation3] sm:$0xf] %vm880, %v885
          %890 = vst.msk [vmem:[#allocation3 + $0x4] sm:$0xf] %vm880, %v886
          %891 = vst.msk [vmem:[#allocation3 + $0x8] sm:$0xf] %vm880, %v887
          %892 = vst.msk [vmem:[#allocation3 + $0xc] sm:$0xf] %vm880, %v888
        $region84: #{tpu_custom_call.1} parent=59 // pred_fallthru
          _
        %s893 = scalar_lea.vmem %s399, %s461 [#allocation4]
        %v894 = vld [vmem:[%s893] sm:$0xff]
        %v895 = vpack.c.bf16 %v894, %v894
        %v896 = vld [vmem:[#allocation7] sm:$0xf]
        %v897 = vld [vmem:[#allocation7 + $0x4] sm:$0xf]
        %v898 = vld [vmem:[#allocation7 + $0x8] sm:$0xf]
        %v899 = vld [vmem:[#allocation7 + $0xc] sm:$0xf]
        %v900 = vld [vmem:[%s2] sm:$0x1]
        %v902 = vlaneseq
        %v903 = vshrl.u32 %v902, 7
        %v904 = vsub.s32 0, %v903
        %v905 = vrot.slane %v900, %v904
        %v911 = vunpack.c.l.b16 %v896
        %v912 = vunpack.c.l.b16 %v897
        %v913 = vunpack.c.l.b16 %v898
        %v914 = vunpack.c.l.b16 %v899
        %v915 = vpack.c.b16 %v912, %v911
        %v916 = vpack.c.b16 %v914, %v913
        %vm919 = vcmask 261120
        %v921 = vsel %vm919, %v895, 0
        %923 = vmatprep.subr.bf16.mxu0 0
        %924 = vmatpush1.bf16.msra.mxu0 %v915
        %925 = vmatprep.subr.bf16.mxu0 0
        %926 = vmatpush1.bf16.msra.mxu0 %v916
        %927 = vmatprep.subr.bf16.mxu0 0
        %928 = vmatpush1.bf16.msra.mxu0 0
        %929 = vmatprep.subr.bf16.mxu0 0
        %930 = vmatpush1.bf16.msra.mxu0 0
        %931 = vmatprep.subr.bf16.mxu0 0
        %932 = vmatpush1.bf16.msra.mxu0 0
        %933 = vmatprep.subr.bf16.mxu0 0
        %934 = vmatpush1.bf16.msra.mxu0 0
        %935 = vmatprep.subr.bf16.mxu0 0
        %936 = vmatpush1.bf16.msra.mxu0 0
        %937 = vmatprep.subr.bf16.mxu0 0
        %938 = vmatpush1.bf16.msra.mxu0 0
        %939 = vmatprep.subr.bf16.mxu0 0
        %940 = vmatpush1.bf16.msra.mxu0 0
        %941 = vmatprep.subr.bf16.mxu0 0
        %942 = vmatpush1.bf16.msra.mxu0 0
        %943 = vmatprep.subr.bf16.mxu0 0
        %944 = vmatpush1.bf16.msra.mxu0 0
        %945 = vmatprep.subr.bf16.mxu0 0
        %946 = vmatpush1.bf16.msra.mxu0 0
        %947 = vmatprep.subr.bf16.mxu0 0
        %948 = vmatpush1.bf16.msra.mxu0 0
        %949 = vmatprep.subr.bf16.mxu0 0
        %950 = vmatpush1.bf16.msra.mxu0 0
        %951 = vmatprep.subr.bf16.mxu0 0
        %952 = vmatpush1.bf16.msra.mxu0 0
        %953 = vmatprep.subr.bf16.mxu0 0
        %954 = vmatpush1.bf16.msra.mxu0 0
        %955 = vmatprep.mubr.bf16.mxu0 0
        %956 = vmatmul.mubr.bf16.gmra.mrb[0].mxu0 %v921
        %v957 = vpop.f32.mrb[0].mxu0
        %v958 = vadd.f32 %v905, %v957
        %v959 = vpop.f32.mrb[0].mxu0
        %v960 = vpop.f32.mrb[0].mxu0
        %v961 = vpop.f32.mrb[0].mxu0
        %962 = vdwg.mxu0
        %964 = vrot.lane.b32.xlu0 %v958, 120
        %v965 = vpop.permute.xlu0 %964
        %967 = vrot.lane.b32.xlu0 %v958, 112
        %v968 = vpop.permute.xlu0 %967
        %970 = vrot.lane.b32.xlu0 %v958, 104
        %v971 = vpop.permute.xlu0 %970
        %v973 = vcombine.low %v958, %v968
        %v974 = vcombine.high %v958, %v968
        %v976 = vunpack.c.l.s4 1983009808
        %v977 = vunpack.c.0.s8 %v976
        %v978 = vlaneseq
        %v979 = vshrl.u32 %v978, 7
        %v980 = vsub.s32 %v977, %v979
        %v981 = vrot.slane %v973, %v980
        %v983 = vunpack.c.l.s4 1983009808
        %v984 = vunpack.c.0.s8 %v983
        %v985 = vlaneseq
        %v986 = vshrl.u32 %v985, 7
        %v987 = vsub.s32 %v984, %v986
        %v988 = vrot.slane %v974, %v987
        %v989 = vcombine.low %v965, %v971
        %v990 = vcombine.high %v965, %v971
        %v992 = vunpack.c.l.s4 1983009808
        %v993 = vunpack.c.0.s8 %v992
        %v994 = vlaneseq
        %v995 = vshrl.u32 %v994, 7
        %v996 = vsub.s32 %v993, %v995
        %v997 = vrot.slane %v989, %v996
        %v999 = vunpack.c.l.s4 1983009808
        %v1000 = vunpack.c.0.s8 %v999
        %v1001 = vlaneseq
        %v1002 = vshrl.u32 %v1001, 7
        %v1003 = vsub.s32 %v1000, %v1002
        %v1004 = vrot.slane %v990, %v1003
        %v1005 = vcombine.low %v981, %v997
        %v1006 = vcombine.high %v981, %v997
        %v1008 = vunpack.c.l.s4 1934713408
        %v1009 = vunpack.c.0.s8 %v1008
        %v1010 = vlaneseq
        %v1011 = vshrl.u32 %v1010, 7
        %v1012 = vsub.s32 %v1009, %v1011
        %v1013 = vrot.slane %v1005, %v1012
        %v1015 = vunpack.c.l.s4 1934713408
        %v1016 = vunpack.c.0.s8 %v1015
        %v1017 = vlaneseq
        %v1018 = vshrl.u32 %v1017, 7
        %v1019 = vsub.s32 %v1016, %v1018
        %v1020 = vrot.slane %v1006, %v1019
        %v1021 = vcombine.low %v988, %v1004
        %v1022 = vcombine.high %v988, %v1004
        %v1024 = vunpack.c.l.s4 1934713408
        %v1025 = vunpack.c.0.s8 %v1024
        %v1026 = vlaneseq
        %v1027 = vshrl.u32 %v1026, 7
        %v1028 = vsub.s32 %v1025, %v1027
        %v1029 = vrot.slane %v1021, %v1028
        %v1031 = vunpack.c.l.s4 1934713408
        %v1032 = vunpack.c.0.s8 %v1031
        %v1033 = vlaneseq
        %v1034 = vshrl.u32 %v1033, 7
        %v1035 = vsub.s32 %v1032, %v1034
        %v1036 = vrot.slane %v1022, %v1035
        %v1037 = vcombine.high %v1013, 0.0
        %v1038 = vcombine.high %v1020, 0.0
        %v1039 = vcombine.high %v1029, 0.0
        %v1040 = vcombine.high %v1036, 0.0
        %v1041 = vcombine.low %v1013, %v1020
        %v1043 = vunpack.c.l.s4 1983009808
        %v1044 = vunpack.c.0.s8 %v1043
        %v1045 = vlaneseq
        %v1046 = vshrl.u32 %v1045, 7
        %v1047 = vsub.s32 %v1044, %v1046
        %v1048 = vrot.slane %v1041, %v1047
        %v1049 = vcombine.low %v1037, %v1038
        %v1051 = vunpack.c.l.s4 1983009808
        %v1052 = vunpack.c.0.s8 %v1051
        %v1053 = vlaneseq
        %v1054 = vshrl.u32 %v1053, 7
        %v1055 = vsub.s32 %v1052, %v1054
        %v1056 = vrot.slane %v1049, %v1055
        %v1057 = vcombine.low %v1029, %v1036
        %v1059 = vunpack.c.l.s4 1983009808
        %v1060 = vunpack.c.0.s8 %v1059
        %v1061 = vlaneseq
        %v1062 = vshrl.u32 %v1061, 7
        %v1063 = vsub.s32 %v1060, %v1062
        %v1064 = vrot.slane %v1057, %v1063
        %v1065 = vcombine.low %v1039, %v1040
        %v1067 = vunpack.c.l.s4 1983009808
        %v1068 = vunpack.c.0.s8 %v1067
        %v1069 = vlaneseq
        %v1070 = vshrl.u32 %v1069, 7
        %v1071 = vsub.s32 %v1068, %v1070
        %v1072 = vrot.slane %v1065, %v1071
        %v1073 = vcombine.low %v1048, %v1056
        %v1074 = vcombine.high %v1048, %v1056
        %v1076 = vunpack.c.l.s4 1934713408
        %v1077 = vunpack.c.0.s8 %v1076
        %v1078 = vlaneseq
        %v1079 = vshrl.u32 %v1078, 7
        %v1080 = vsub.s32 %v1077, %v1079
        %v1081 = vrot.slane %v1073, %v1080
        %v1083 = vunpack.c.l.s4 1934713408
        %v1084 = vunpack.c.0.s8 %v1083
        %v1085 = vlaneseq
        %v1086 = vshrl.u32 %v1085, 7
        %v1087 = vsub.s32 %v1084, %v1086
        %v1088 = vrot.slane %v1074, %v1087
        %v1089 = vcombine.low %v1064, %v1072
        %v1090 = vcombine.high %v1064, %v1072
        %v1092 = vunpack.c.l.s4 1934713408
        %v1093 = vunpack.c.0.s8 %v1092
        %v1094 = vlaneseq
        %v1095 = vshrl.u32 %v1094, 7
        %v1096 = vsub.s32 %v1093, %v1095
        %v1097 = vrot.slane %v1089, %v1096
        %v1099 = vunpack.c.l.s4 1934713408
        %v1100 = vunpack.c.0.s8 %v1099
        %v1101 = vlaneseq
        %v1102 = vshrl.u32 %v1101, 7
        %v1103 = vsub.s32 %v1100, %v1102
        %v1104 = vrot.slane %v1090, %v1103
        %v1105 = vcombine.low %v1081, %v1097
        %v1106 = vcombine.high %v1081, %v1097
        %v1107 = vcombine.low %v1088, %v1104
        %v1108 = vcombine.high %v1088, %v1104
        %s1109 = scalar_lea.vmem %s7, %s461
        %v1110 = vld [vmem:[%s1109] sm:$0xff]
        %s1111 = scalar_lea.vmem [#allocation12], %s461
        %v1112 = vld [vmem:[%s1111] sm:$0xff]
        %v1113 = vmul.f32 %v1105, %v1110
        %v1114 = vmul.f32 %v1106, %v1110
        %v1115 = vmul.f32 %v1107, %v1110
        %v1116 = vmul.f32 %v1108, %v1110
        %1121 = vrot.lane.b32.xlu0 %v1105, 124
        %v1122 = vpop.permute.xlu0 %1121
        %1123 = vrot.lane.b32.xlu0 %v1106, 124
        %v1124 = vpop.permute.xlu0 %1123
        %1125 = vrot.lane.b32.xlu0 %v1107, 124
        %v1126 = vpop.permute.xlu0 %1125
        %1127 = vrot.lane.b32.xlu0 %v1108, 124
        %v1128 = vpop.permute.xlu0 %1127
        %1133 = vrot.lane.b32.xlu0 %v1105, 4
        %v1134 = vpop.permute.xlu0 %1133
        %1135 = vrot.lane.b32.xlu0 %v1106, 4
        %v1136 = vpop.permute.xlu0 %1135
        %1137 = vrot.lane.b32.xlu0 %v1107, 4
        %v1138 = vpop.permute.xlu0 %1137
        %1139 = vrot.lane.b32.xlu0 %v1108, 4
        %v1140 = vpop.permute.xlu0 %1139
        %vm1145 = vcmask 31744
        %v1146 = vsel %vm1145, %v1122, %v1134
        %v1147 = vsel %vm1145, %v1124, %v1136
        %v1148 = vsel %vm1145, %v1126, %v1138
        %v1149 = vsel %vm1145, %v1128, %v1140
        %v1150 = vmul.f32 %v1146, %v1112
        %v1151 = vmul.f32 %v1147, %v1112
        %v1152 = vmul.f32 %v1148, %v1112
        %v1153 = vmul.f32 %v1149, %v1112
        %v1154 = vadd.f32 %v1113, %v1150
        %v1155 = vadd.f32 %v1114, %v1151
        %v1156 = vadd.f32 %v1115, %v1152
        %v1157 = vadd.f32 %v1116, %v1153
        %v1158 = vmul.f32 %v1154, 0.35355338
        %v1159 = vmul.f32 %v1155, 0.35355338
        %v1160 = vmul.f32 %v1156, 0.35355338
        %v1161 = vmul.f32 %v1157, 0.35355338
        %v1162 = vpack.c.bf16 %v1158, %v1158
        %v1163 = vpack.c.bf16 %v1159, %v1159
        %v1164 = vpack.c.bf16 %v1160, %v1160
        %v1165 = vpack.c.bf16 %v1161, %v1161
        %v1166 = vld [vmem:[#allocation2] sm:$0xf]
        %v1167 = vld [vmem:[#allocation2 + $0x4] sm:$0xf]
        %v1168 = vld [vmem:[#allocation2 + $0x8] sm:$0xf]
        %v1169 = vld [vmem:[#allocation2 + $0xc] sm:$0xf]
        %vm1170 = vcmask 64512
        %v1172 = vsel %vm1170, %v1162, 0
        %v1175 = vsel %vm1170, %v1166, 0
        %1177 = vmatprep.subr.bf16.mxu0 0
        %1178 = vmatpush1.bf16.xpose.msra.mxu0 %v1175
        %1179 = vmatprep.subr.bf16.mxu0 0
        %1180 = vmatpush1.bf16.xpose.msra.mxu0 0
        %1181 = vmatprep.subr.bf16.mxu0 0
        %1182 = vmatpush1.bf16.xpose.msra.mxu0 0
        %1183 = vmatprep.subr.bf16.mxu0 0
        %1184 = vmatpush1.bf16.xpose.msra.mxu0 0
        %1185 = vmatprep.subr.bf16.mxu0 0
        %1186 = vmatpush1.bf16.xpose.msra.mxu0 0
        %1187 = vmatprep.subr.bf16.mxu0 0
        %1188 = vmatpush1.bf16.xpose.msra.mxu0 0
        %1189 = vmatprep.subr.bf16.mxu0 0
        %1190 = vmatpush1.bf16.xpose.msra.mxu0 0
        %1191 = vmatprep.subr.bf16.mxu0 0
        %1192 = vmatpush1.bf16.xpose.msra.mxu0 0
        %1193 = vmatprep.subr.bf16.mxu0 0
        %1194 = vmatpush1.bf16.xpose.msra.mxu0 0
        %1195 = vmatprep.subr.bf16.mxu0 0
        %1196 = vmatpush1.bf16.xpose.msra.mxu0 0
        %1197 = vmatprep.subr.bf16.mxu0 0
        %1198 = vmatpush1.bf16.xpose.msra.mxu0 0
        %1199 = vmatprep.subr.bf16.mxu0 0
        %1200 = vmatpush1.bf16.xpose.msra.mxu0 0
        %1201 = vmatprep.subr.bf16.mxu0 0
        %1202 = vmatpush1.bf16.xpose.msra.mxu0 0
        %1203 = vmatprep.subr.bf16.mxu0 0
        %1204 = vmatpush1.bf16.xpose.msra.mxu0 0
        %1205 = vmatprep.subr.bf16.mxu0 0
        %1206 = vmatpush1.bf16.xpose.msra.mxu0 0
        %1207 = vmatprep.subr.bf16.mxu0 0
        %1208 = vmatpush1.bf16.xpose.msra.mxu0 0
        %1209 = vmatprep.mubr.bf16.mxu0 0
        %1210 = vmatmul.mubr.bf16.gmra.mrb[0].mxu0 %v1172
        %v1211 = vpop.f32.mrb[0].mxu0
        %v1212 = vadd.f32 0.0, %v1211
        %v1213 = vpop.f32.mrb[0].mxu0
        %v1214 = vpop.f32.mrb[0].mxu0
        %v1215 = vpop.f32.mrb[0].mxu0
        %1216 = vdwg.mxu0
        %v1218 = vsel %vm1170, %v1163, 0
        %v1221 = vsel %vm1170, %v1167, 0
        %1223 = vmatprep.subr.bf16.mxu0 0
        %1224 = vmatpush1.bf16.xpose.msra.mxu0 %v1221
        %1225 = vmatprep.subr.bf16.mxu0 0
        %1226 = vmatpush1.bf16.xpose.msra.mxu0 0
        %1227 = vmatprep.subr.bf16.mxu0 0
        %1228 = vmatpush1.bf16.xpose.msra.mxu0 0
        %1229 = vmatprep.subr.bf16.mxu0 0
        %1230 = vmatpush1.bf16.xpose.msra.mxu0 0
        %1231 = vmatprep.subr.bf16.mxu0 0
        %1232 = vmatpush1.bf16.xpose.msra.mxu0 0
        %1233 = vmatprep.subr.bf16.mxu0 0
        %1234 = vmatpush1.bf16.xpose.msra.mxu0 0
        %1235 = vmatprep.subr.bf16.mxu0 0
        %1236 = vmatpush1.bf16.xpose.msra.mxu0 0
        %1237 = vmatprep.subr.bf16.mxu0 0
        %1238 = vmatpush1.bf16.xpose.msra.mxu0 0
        %1239 = vmatprep.subr.bf16.mxu0 0
        %1240 = vmatpush1.bf16.xpose.msra.mxu0 0
        %1241 = vmatprep.subr.bf16.mxu0 0
        %1242 = vmatpush1.bf16.xpose.msra.mxu0 0
        %1243 = vmatprep.subr.bf16.mxu0 0
        %1244 = vmatpush1.bf16.xpose.msra.mxu0 0
        %1245 = vmatprep.subr.bf16.mxu0 0
        %1246 = vmatpush1.bf16.xpose.msra.mxu0 0
        %1247 = vmatprep.subr.bf16.mxu0 0
        %1248 = vmatpush1.bf16.xpose.msra.mxu0 0
        %1249 = vmatprep.subr.bf16.mxu0 0
        %1250 = vmatpush1.bf16.xpose.msra.mxu0 0
        %1251 = vmatprep.subr.bf16.mxu0 0
        %1252 = vmatpush1.bf16.xpose.msra.mxu0 0
        %1253 = vmatprep.subr.bf16.mxu0 0
        %1254 = vmatpush1.bf16.xpose.msra.mxu0 0
        %1255 = vmatprep.mubr.bf16.mxu0 0
        %1256 = vmatmul.mubr.bf16.gmra.mrb[0].mxu0 %v1218
        %v1257 = vpop.f32.mrb[0].mxu0
        %v1258 = vadd.f32 0.0, %v1257
        %v1259 = vpop.f32.mrb[0].mxu0
        %v1260 = vpop.f32.mrb[0].mxu0
        %v1261 = vpop.f32.mrb[0].mxu0
        %1262 = vdwg.mxu0
        %v1264 = vsel %vm1170, %v1164, 0
        %v1267 = vsel %vm1170, %v1168, 0
        %1269 = vmatprep.subr.bf16.mxu0 0
        %1270 = vmatpush1.bf16.xpose.msra.mxu0 %v1267
        %1271 = vmatprep.subr.bf16.mxu0 0
        %1272 = vmatpush1.bf16.xpose.msra.mxu0 0
        %1273 = vmatprep.subr.bf16.mxu0 0
        %1274 = vmatpush1.bf16.xpose.msra.mxu0 0
        %1275 = vmatprep.subr.bf16.mxu0 0
        %1276 = vmatpush1.bf16.xpose.msra.mxu0 0
        %1277 = vmatprep.subr.bf16.mxu0 0
        %1278 = vmatpush1.bf16.xpose.msra.mxu0 0
        %1279 = vmatprep.subr.bf16.mxu0 0
        %1280 = vmatpush1.bf16.xpose.msra.mxu0 0
        %1281 = vmatprep.subr.bf16.mxu0 0
        %1282 = vmatpush1.bf16.xpose.msra.mxu0 0
        %1283 = vmatprep.subr.bf16.mxu0 0
        %1284 = vmatpush1.bf16.xpose.msra.mxu0 0
        %1285 = vmatprep.subr.bf16.mxu0 0
        %1286 = vmatpush1.bf16.xpose.msra.mxu0 0
        %1287 = vmatprep.subr.bf16.mxu0 0
        %1288 = vmatpush1.bf16.xpose.msra.mxu0 0
        %1289 = vmatprep.subr.bf16.mxu0 0
        %1290 = vmatpush1.bf16.xpose.msra.mxu0 0
        %1291 = vmatprep.subr.bf16.mxu0 0
        %1292 = vmatpush1.bf16.xpose.msra.mxu0 0
        %1293 = vmatprep.subr.bf16.mxu0 0
        %1294 = vmatpush1.bf16.xpose.msra.mxu0 0
        %1295 = vmatprep.subr.bf16.mxu0 0
        %1296 = vmatpush1.bf16.xpose.msra.mxu0 0
        %1297 = vmatprep.subr.bf16.mxu0 0
        %1298 = vmatpush1.bf16.xpose.msra.mxu0 0
        %1299 = vmatprep.subr.bf16.mxu0 0
        %1300 = vmatpush1.bf16.xpose.msra.mxu0 0
        %1301 = vmatprep.mubr.bf16.mxu0 0
        %1302 = vmatmul.mubr.bf16.gmra.mrb[0].mxu0 %v1264
        %v1303 = vpop.f32.mrb[0].mxu0
        %v1304 = vadd.f32 0.0, %v1303
        %v1305 = vpop.f32.mrb[0].mxu0
        %v1306 = vpop.f32.mrb[0].mxu0
        %v1307 = vpop.f32.mrb[0].mxu0
        %1308 = vdwg.mxu0
        %v1310 = vsel %vm1170, %v1165, 0
        %v1313 = vsel %vm1170, %v1169, 0
        %1315 = vmatprep.subr.bf16.mxu0 0
        %1316 = vmatpush1.bf16.xpose.msra.mxu0 %v1313
        %1317 = vmatprep.subr.bf16.mxu0 0
        %1318 = vmatpush1.bf16.xpose.msra.mxu0 0
        %1319 = vmatprep.subr.bf16.mxu0 0
        %1320 = vmatpush1.bf16.xpose.msra.mxu0 0
        %1321 = vmatprep.subr.bf16.mxu0 0
        %1322 = vmatpush1.bf16.xpose.msra.mxu0 0
        %1323 = vmatprep.subr.bf16.mxu0 0
        %1324 = vmatpush1.bf16.xpose.msra.mxu0 0
        %1325 = vmatprep.subr.bf16.mxu0 0
        %1326 = vmatpush1.bf16.xpose.msra.mxu0 0
        %1327 = vmatprep.subr.bf16.mxu0 0
        %1328 = vmatpush1.bf16.xpose.msra.mxu0 0
        %1329 = vmatprep.subr.bf16.mxu0 0
        %1330 = vmatpush1.bf16.xpose.msra.mxu0 0
        %1331 = vmatprep.subr.bf16.mxu0 0
        %1332 = vmatpush1.bf16.xpose.msra.mxu0 0
        %1333 = vmatprep.subr.bf16.mxu0 0
        %1334 = vmatpush1.bf16.xpose.msra.mxu0 0
        %1335 = vmatprep.subr.bf16.mxu0 0
        %1336 = vmatpush1.bf16.xpose.msra.mxu0 0
        %1337 = vmatprep.subr.bf16.mxu0 0
        %1338 = vmatpush1.bf16.xpose.msra.mxu0 0
        %1339 = vmatprep.subr.bf16.mxu0 0
        %1340 = vmatpush1.bf16.xpose.msra.mxu0 0
        %1341 = vmatprep.subr.bf16.mxu0 0
        %1342 = vmatpush1.bf16.xpose.msra.mxu0 0
        %1343 = vmatprep.subr.bf16.mxu0 0
        %1344 = vmatpush1.bf16.xpose.msra.mxu0 0
        %1345 = vmatprep.subr.bf16.mxu0 0
        %1346 = vmatpush1.bf16.xpose.msra.mxu0 0
        %1347 = vmatprep.mubr.bf16.mxu0 0
        %1348 = vmatmul.mubr.bf16.gmra.mrb[0].mxu0 %v1310
        %v1349 = vpop.f32.mrb[0].mxu0
        %v1350 = vadd.f32 0.0, %v1349
        %v1351 = vpop.f32.mrb[0].mxu0
        %v1352 = vpop.f32.mrb[0].mxu0
        %v1353 = vpop.f32.mrb[0].mxu0
        %1354 = vdwg.mxu0
        %v1355 = vld [vmem:[%s459] sm:$0xff]
        %vm1356 = vcmp.gt.f32.partialorder %v1355, 0.0
        %v1357 = vsel %vm1356, 1, 0
        %vm1358 = vcmp.eq.s32.totalorder %v1357, 1
        %v1359 = vsel %vm1358, -10000.0, %v1212
        %v1360 = vsel %vm1358, -10000.0, %v1258
        %v1361 = vsel %vm1358, -10000.0, %v1304
        %v1362 = vsel %vm1358, -10000.0, %v1350
        %v1363 = vsel %vm1170, %v1359, -inf
        %1364 = vmax.xlane.f32.xlu0 %v1363
        %v1365 = vpop.xlane.xlu0 %1364
        %v1366 = vsel %vm1170, %v1360, -inf
        %1367 = vmax.xlane.f32.xlu0 %v1366
        %v1368 = vpop.xlane.xlu0 %1367
        %v1369 = vsel %vm1170, %v1361, -inf
        %1370 = vmax.xlane.f32.xlu0 %v1369
        %v1371 = vpop.xlane.xlu0 %1370
        %v1372 = vsel %vm1170, %v1362, -inf
        %1373 = vmax.xlane.f32.xlu0 %v1372
        %v1374 = vpop.xlane.xlu0 %1373
        %v1375 = vsub.f32 %v1359, %v1365
        %v1376 = vsub.f32 %v1360, %v1368
        %v1377 = vsub.f32 %v1361, %v1371
        %v1378 = vsub.f32 %v1362, %v1374
        %v1379 = vmul.f32 %v1375, 1.442695
        %v1380 = vpow.pop %v1379
        %v1381 = vmul.f32 %v1376, 1.442695
        %v1382 = vpow.pop %v1381
        %v1383 = vmul.f32 %v1377, 1.442695
        %v1384 = vpow.pop %v1383
        %v1385 = vmul.f32 %v1378, 1.442695
        %v1386 = vpow.pop %v1385
        %v1387 = vsel %vm1170, %v1380, 0.0
        %1388 = vadd.xlane.f32.xlu0 %v1387
        %v1389 = vpop.xlane.xlu0 %1388
        %v1390 = vsel %vm1170, %v1382, 0.0
        %1391 = vadd.xlane.f32.xlu0 %v1390
        %v1392 = vpop.xlane.xlu0 %1391
        %v1393 = vsel %vm1170, %v1384, 0.0
        %1394 = vadd.xlane.f32.xlu0 %v1393
        %v1395 = vpop.xlane.xlu0 %1394
        %v1396 = vsel %vm1170, %v1386, 0.0
        %1397 = vadd.xlane.f32.xlu0 %v1396
        %v1398 = vpop.xlane.xlu0 %1397
        %v1399 = vrcp.pop %v1389
        %v1400 = vrcp.pop %v1392
        %v1401 = vrcp.pop %v1395
        %v1402 = vrcp.pop %v1398
        %v1403 = vmul.f32 %v1380, %v1399
        %v1404 = vmul.f32 %v1382, %v1400
        %v1405 = vmul.f32 %v1384, %v1401
        %v1406 = vmul.f32 %v1386, %v1402
        %v1407 = vpack.c.bf16 %v1403, %v1403
        %v1408 = vpack.c.bf16 %v1404, %v1404
        %v1409 = vpack.c.bf16 %v1405, %v1405
        %v1410 = vpack.c.bf16 %v1406, %v1406
        %v1411 = vld [vmem:[#allocation3] sm:$0xf]
        %v1412 = vld [vmem:[#allocation3 + $0x4] sm:$0xf]
        %v1413 = vld [vmem:[#allocation3 + $0x8] sm:$0xf]
        %v1414 = vld [vmem:[#allocation3 + $0xc] sm:$0xf]
        %v1416 = vsel %vm1170, %v1407, 0
        %vm1418 = vcmask 1043456
        %v1420 = vsel %vm1418, %v1411, 0
        %1422 = vmatprep.subr.bf16.mxu0 0
        %1423 = vmatpush1.bf16.msra.mxu0 %v1420
        %1424 = vmatprep.subr.bf16.mxu0 0
        %1425 = vmatpush1.bf16.msra.mxu0 0
        %1426 = vmatprep.subr.bf16.mxu0 0
        %1427 = vmatpush1.bf16.msra.mxu0 0
        %1428 = vmatprep.subr.bf16.mxu0 0
        %1429 = vmatpush1.bf16.msra.mxu0 0
        %1430 = vmatprep.subr.bf16.mxu0 0
        %1431 = vmatpush1.bf16.msra.mxu0 0
        %1432 = vmatprep.subr.bf16.mxu0 0
        %1433 = vmatpush1.bf16.msra.mxu0 0
        %1434 = vmatprep.subr.bf16.mxu0 0
        %1435 = vmatpush1.bf16.msra.mxu0 0
        %1436 = vmatprep.subr.bf16.mxu0 0
        %1437 = vmatpush1.bf16.msra.mxu0 0
        %1438 = vmatprep.subr.bf16.mxu0 0
        %1439 = vmatpush1.bf16.msra.mxu0 0
        %1440 = vmatprep.subr.bf16.mxu0 0
        %1441 = vmatpush1.bf16.msra.mxu0 0
        %1442 = vmatprep.subr.bf16.mxu0 0
        %1443 = vmatpush1.bf16.msra.mxu0 0
        %1444 = vmatprep.subr.bf16.mxu0 0
        %1445 = vmatpush1.bf16.msra.mxu0 0
        %1446 = vmatprep.subr.bf16.mxu0 0
        %1447 = vmatpush1.bf16.msra.mxu0 0
        %1448 = vmatprep.subr.bf16.mxu0 0
        %1449 = vmatpush1.bf16.msra.mxu0 0
        %1450 = vmatprep.subr.bf16.mxu0 0
        %1451 = vmatpush1.bf16.msra.mxu0 0
        %1452 = vmatprep.subr.bf16.mxu0 0
        %1453 = vmatpush1.bf16.msra.mxu0 0
        %1454 = vmatprep.mubr.bf16.mxu0 0
        %1455 = vmatmul.mubr.bf16.gmra.mrb[0].mxu0 %v1416
        %v1456 = vpop.f32.mrb[0].mxu0
        %v1457 = vadd.f32 0.0, %v1456
        %v1458 = vpop.f32.mrb[0].mxu0
        %v1459 = vpop.f32.mrb[0].mxu0
        %v1460 = vpop.f32.mrb[0].mxu0
        %1461 = vdwg.mxu0
        %v1463 = vsel %vm1170, %v1408, 0
        %v1466 = vsel %vm1418, %v1412, 0
        %1468 = vmatprep.subr.bf16.mxu0 0
        %1469 = vmatpush1.bf16.msra.mxu0 %v1466
        %1470 = vmatprep.subr.bf16.mxu0 0
        %1471 = vmatpush1.bf16.msra.mxu0 0
        %1472 = vmatprep.subr.bf16.mxu0 0
        %1473 = vmatpush1.bf16.msra.mxu0 0
        %1474 = vmatprep.subr.bf16.mxu0 0
        %1475 = vmatpush1.bf16.msra.mxu0 0
        %1476 = vmatprep.subr.bf16.mxu0 0
        %1477 = vmatpush1.bf16.msra.mxu0 0
        %1478 = vmatprep.subr.bf16.mxu0 0
        %1479 = vmatpush1.bf16.msra.mxu0 0
        %1480 = vmatprep.subr.bf16.mxu0 0
        %1481 = vmatpush1.bf16.msra.mxu0 0
        %1482 = vmatprep.subr.bf16.mxu0 0
        %1483 = vmatpush1.bf16.msra.mxu0 0
        %1484 = vmatprep.subr.bf16.mxu0 0
        %1485 = vmatpush1.bf16.msra.mxu0 0
        %1486 = vmatprep.subr.bf16.mxu0 0
        %1487 = vmatpush1.bf16.msra.mxu0 0
        %1488 = vmatprep.subr.bf16.mxu0 0
        %1489 = vmatpush1.bf16.msra.mxu0 0
        %1490 = vmatprep.subr.bf16.mxu0 0
        %1491 = vmatpush1.bf16.msra.mxu0 0
        %1492 = vmatprep.subr.bf16.mxu0 0
        %1493 = vmatpush1.bf16.msra.mxu0 0
        %1494 = vmatprep.subr.bf16.mxu0 0
        %1495 = vmatpush1.bf16.msra.mxu0 0
        %1496 = vmatprep.subr.bf16.mxu0 0
        %1497 = vmatpush1.bf16.msra.mxu0 0
        %1498 = vmatprep.subr.bf16.mxu0 0
        %1499 = vmatpush1.bf16.msra.mxu0 0
        %1500 = vmatprep.mubr.bf16.mxu0 0
        %1501 = vmatmul.mubr.bf16.gmra.mrb[0].mxu0 %v1463
        %v1502 = vpop.f32.mrb[0].mxu0
        %v1503 = vadd.f32 0.0, %v1502
        %v1504 = vpop.f32.mrb[0].mxu0
        %v1505 = vpop.f32.mrb[0].mxu0
        %v1506 = vpop.f32.mrb[0].mxu0
        %1507 = vdwg.mxu0
        %v1509 = vsel %vm1170, %v1409, 0
        %v1512 = vsel %vm1418, %v1413, 0
        %1514 = vmatprep.subr.bf16.mxu0 0
        %1515 = vmatpush1.bf16.msra.mxu0 %v1512
        %1516 = vmatprep.subr.bf16.mxu0 0
        %1517 = vmatpush1.bf16.msra.mxu0 0
        %1518 = vmatprep.subr.bf16.mxu0 0
        %1519 = vmatpush1.bf16.msra.mxu0 0
        %1520 = vmatprep.subr.bf16.mxu0 0
        %1521 = vmatpush1.bf16.msra.mxu0 0
        %1522 = vmatprep.subr.bf16.mxu0 0
        %1523 = vmatpush1.bf16.msra.mxu0 0
        %1524 = vmatprep.subr.bf16.mxu0 0
        %1525 = vmatpush1.bf16.msra.mxu0 0
        %1526 = vmatprep.subr.bf16.mxu0 0
        %1527 = vmatpush1.bf16.msra.mxu0 0
        %1528 = vmatprep.subr.bf16.mxu0 0
        %1529 = vmatpush1.bf16.msra.mxu0 0
        %1530 = vmatprep.subr.bf16.mxu0 0
        %1531 = vmatpush1.bf16.msra.mxu0 0
        %1532 = vmatprep.subr.bf16.mxu0 0
        %1533 = vmatpush1.bf16.msra.mxu0 0
        %1534 = vmatprep.subr.bf16.mxu0 0
        %1535 = vmatpush1.bf16.msra.mxu0 0
        %1536 = vmatprep.subr.bf16.mxu0 0
        %1537 = vmatpush1.bf16.msra.mxu0 0
        %1538 = vmatprep.subr.bf16.mxu0 0
        %1539 = vmatpush1.bf16.msra.mxu0 0
        %1540 = vmatprep.subr.bf16.mxu0 0
        %1541 = vmatpush1.bf16.msra.mxu0 0
        %1542 = vmatprep.subr.bf16.mxu0 0
        %1543 = vmatpush1.bf16.msra.mxu0 0
        %1544 = vmatprep.subr.bf16.mxu0 0
        %1545 = vmatpush1.bf16.msra.mxu0 0
        %1546 = vmatprep.mubr.bf16.mxu0 0
        %1547 = vmatmul.mubr.bf16.gmra.mrb[0].mxu0 %v1509
        %v1548 = vpop.f32.mrb[0].mxu0
        %v1549 = vadd.f32 0.0, %v1548
        %v1550 = vpop.f32.mrb[0].mxu0
        %v1551 = vpop.f32.mrb[0].mxu0
        %v1552 = vpop.f32.mrb[0].mxu0
        %1553 = vdwg.mxu0
        %v1555 = vsel %vm1170, %v1410, 0
        %v1558 = vsel %vm1418, %v1414, 0
        %1560 = vmatprep.subr.bf16.mxu0 0
        %1561 = vmatpush1.bf16.msra.mxu0 %v1558
        %1562 = vmatprep.subr.bf16.mxu0 0
        %1563 = vmatpush1.bf16.msra.mxu0 0
        %1564 = vmatprep.subr.bf16.mxu0 0
        %1565 = vmatpush1.bf16.msra.mxu0 0
        %1566 = vmatprep.subr.bf16.mxu0 0
        %1567 = vmatpush1.bf16.msra.mxu0 0
        %1568 = vmatprep.subr.bf16.mxu0 0
        %1569 = vmatpush1.bf16.msra.mxu0 0
        %1570 = vmatprep.subr.bf16.mxu0 0
        %1571 = vmatpush1.bf16.msra.mxu0 0
        %1572 = vmatprep.subr.bf16.mxu0 0
        %1573 = vmatpush1.bf16.msra.mxu0 0
        %1574 = vmatprep.subr.bf16.mxu0 0
        %1575 = vmatpush1.bf16.msra.mxu0 0
        %1576 = vmatprep.subr.bf16.mxu0 0
        %1577 = vmatpush1.bf16.msra.mxu0 0
        %1578 = vmatprep.subr.bf16.mxu0 0
        %1579 = vmatpush1.bf16.msra.mxu0 0
        %1580 = vmatprep.subr.bf16.mxu0 0
        %1581 = vmatpush1.bf16.msra.mxu0 0
        %1582 = vmatprep.subr.bf16.mxu0 0
        %1583 = vmatpush1.bf16.msra.mxu0 0
        %1584 = vmatprep.subr.bf16.mxu0 0
        %1585 = vmatpush1.bf16.msra.mxu0 0
        %1586 = vmatprep.subr.bf16.mxu0 0
        %1587 = vmatpush1.bf16.msra.mxu0 0
        %1588 = vmatprep.subr.bf16.mxu0 0
        %1589 = vmatpush1.bf16.msra.mxu0 0
        %1590 = vmatprep.subr.bf16.mxu0 0
        %1591 = vmatpush1.bf16.msra.mxu0 0
        %1592 = vmatprep.mubr.bf16.mxu0 0
        %1593 = vmatmul.mubr.bf16.gmra.mrb[0].mxu0 %v1555
        %v1594 = vpop.f32.mrb[0].mxu0
        %v1595 = vadd.f32 0.0, %v1594
        %v1596 = vpop.f32.mrb[0].mxu0
        %v1597 = vpop.f32.mrb[0].mxu0
        %v1598 = vpop.f32.mrb[0].mxu0
        %1599 = vdwg.mxu0
        %v1600 = vpack.c.bf16 %v1457, %v1457
        %v1601 = vpack.c.bf16 %v1503, %v1503
        %v1602 = vpack.c.bf16 %v1549, %v1549
        %v1603 = vpack.c.bf16 %v1595, %v1595
        %v1604 = vld [vmem:[%s5] sm:$0xf]
        %v1605 = vld [vmem:[%s5 + $0x4] sm:$0xf]
        %v1606 = vld [vmem:[%s5 + $0x8] sm:$0xf]
        %v1607 = vld [vmem:[%s5 + $0xc] sm:$0xf]
        %v1609 = vsel %vm1170, %v1600, 0
        %v1612 = vsel %vm1418, %v1604, 0
        %1614 = vmatprep.subr.bf16.mxu0 0
        %1615 = vmatpush1.bf16.msra.mxu0 %v1612
        %1616 = vmatprep.subr.bf16.mxu0 0
        %1617 = vmatpush1.bf16.msra.mxu0 0
        %1618 = vmatprep.subr.bf16.mxu0 0
        %1619 = vmatpush1.bf16.msra.mxu0 0
        %1620 = vmatprep.subr.bf16.mxu0 0
        %1621 = vmatpush1.bf16.msra.mxu0 0
        %1622 = vmatprep.subr.bf16.mxu0 0
        %1623 = vmatpush1.bf16.msra.mxu0 0
        %1624 = vmatprep.subr.bf16.mxu0 0
        %1625 = vmatpush1.bf16.msra.mxu0 0
        %1626 = vmatprep.subr.bf16.mxu0 0
        %1627 = vmatpush1.bf16.msra.mxu0 0
        %1628 = vmatprep.subr.bf16.mxu0 0
        %1629 = vmatpush1.bf16.msra.mxu0 0
        %1630 = vmatprep.subr.bf16.mxu0 0
        %1631 = vmatpush1.bf16.msra.mxu0 0
        %1632 = vmatprep.subr.bf16.mxu0 0
        %1633 = vmatpush1.bf16.msra.mxu0 0
        %1634 = vmatprep.subr.bf16.mxu0 0
        %1635 = vmatpush1.bf16.msra.mxu0 0
        %1636 = vmatprep.subr.bf16.mxu0 0
        %1637 = vmatpush1.bf16.msra.mxu0 0
        %1638 = vmatprep.subr.bf16.mxu0 0
        %1639 = vmatpush1.bf16.msra.mxu0 0
        %1640 = vmatprep.subr.bf16.mxu0 0
        %1641 = vmatpush1.bf16.msra.mxu0 0
        %1642 = vmatprep.subr.bf16.mxu0 0
        %1643 = vmatpush1.bf16.msra.mxu0 0
        %1644 = vmatprep.subr.bf16.mxu0 0
        %1645 = vmatpush1.bf16.msra.mxu0 0
        %1646 = vmatprep.mubr.bf16.mxu0 0
        %1647 = vmatmul.mubr.bf16.gmra.mrb[0].mxu0 %v1609
        %v1648 = vpop.f32.mrb[0].mxu0
        %v1649 = vadd.f32 0.0, %v1648
        %v1650 = vpop.f32.mrb[0].mxu0
        %v1651 = vpop.f32.mrb[0].mxu0
        %v1652 = vpop.f32.mrb[0].mxu0
        %1653 = vdwg.mxu0
        %v1655 = vsel %vm1170, %v1601, 0
        %v1658 = vsel %vm1418, %v1605, 0
        %1660 = vmatprep.subr.bf16.mxu0 0
        %1661 = vmatpush1.bf16.msra.mxu0 %v1658
        %1662 = vmatprep.subr.bf16.mxu0 0
        %1663 = vmatpush1.bf16.msra.mxu0 0
        %1664 = vmatprep.subr.bf16.mxu0 0
        %1665 = vmatpush1.bf16.msra.mxu0 0
        %1666 = vmatprep.subr.bf16.mxu0 0
        %1667 = vmatpush1.bf16.msra.mxu0 0
        %1668 = vmatprep.subr.bf16.mxu0 0
        %1669 = vmatpush1.bf16.msra.mxu0 0
        %1670 = vmatprep.subr.bf16.mxu0 0
        %1671 = vmatpush1.bf16.msra.mxu0 0
        %1672 = vmatprep.subr.bf16.mxu0 0
        %1673 = vmatpush1.bf16.msra.mxu0 0
        %1674 = vmatprep.subr.bf16.mxu0 0
        %1675 = vmatpush1.bf16.msra.mxu0 0
        %1676 = vmatprep.subr.bf16.mxu0 0
        %1677 = vmatpush1.bf16.msra.mxu0 0
        %1678 = vmatprep.subr.bf16.mxu0 0
        %1679 = vmatpush1.bf16.msra.mxu0 0
        %1680 = vmatprep.subr.bf16.mxu0 0
        %1681 = vmatpush1.bf16.msra.mxu0 0
        %1682 = vmatprep.subr.bf16.mxu0 0
        %1683 = vmatpush1.bf16.msra.mxu0 0
        %1684 = vmatprep.subr.bf16.mxu0 0
        %1685 = vmatpush1.bf16.msra.mxu0 0
        %1686 = vmatprep.subr.bf16.mxu0 0
        %1687 = vmatpush1.bf16.msra.mxu0 0
        %1688 = vmatprep.subr.bf16.mxu0 0
        %1689 = vmatpush1.bf16.msra.mxu0 0
        %1690 = vmatprep.subr.bf16.mxu0 0
        %1691 = vmatpush1.bf16.msra.mxu0 0
        %1692 = vmatprep.mubr.bf16.mxu0 0
        %1693 = vmatmul.mubr.bf16.gmra.mrb[0].mxu0 %v1655
        %v1694 = vpop.f32.mrb[0].mxu0
        %v1695 = vadd.f32 0.0, %v1694
        %v1696 = vpop.f32.mrb[0].mxu0
        %v1697 = vpop.f32.mrb[0].mxu0
        %v1698 = vpop.f32.mrb[0].mxu0
        %1699 = vdwg.mxu0
        %v1701 = vsel %vm1170, %v1602, 0
        %v1704 = vsel %vm1418, %v1606, 0
        %1706 = vmatprep.subr.bf16.mxu0 0
        %1707 = vmatpush1.bf16.msra.mxu0 %v1704
        %1708 = vmatprep.subr.bf16.mxu0 0
        %1709 = vmatpush1.bf16.msra.mxu0 0
        %1710 = vmatprep.subr.bf16.mxu0 0
        %1711 = vmatpush1.bf16.msra.mxu0 0
        %1712 = vmatprep.subr.bf16.mxu0 0
        %1713 = vmatpush1.bf16.msra.mxu0 0
        %1714 = vmatprep.subr.bf16.mxu0 0
        %1715 = vmatpush1.bf16.msra.mxu0 0
        %1716 = vmatprep.subr.bf16.mxu0 0
        %1717 = vmatpush1.bf16.msra.mxu0 0
        %1718 = vmatprep.subr.bf16.mxu0 0
        %1719 = vmatpush1.bf16.msra.mxu0 0
        %1720 = vmatprep.subr.bf16.mxu0 0
        %1721 = vmatpush1.bf16.msra.mxu0 0
        %1722 = vmatprep.subr.bf16.mxu0 0
        %1723 = vmatpush1.bf16.msra.mxu0 0
        %1724 = vmatprep.subr.bf16.mxu0 0
        %1725 = vmatpush1.bf16.msra.mxu0 0
        %1726 = vmatprep.subr.bf16.mxu0 0
        %1727 = vmatpush1.bf16.msra.mxu0 0
        %1728 = vmatprep.subr.bf16.mxu0 0
        %1729 = vmatpush1.bf16.msra.mxu0 0
        %1730 = vmatprep.subr.bf16.mxu0 0
        %1731 = vmatpush1.bf16.msra.mxu0 0
        %1732 = vmatprep.subr.bf16.mxu0 0
        %1733 = vmatpush1.bf16.msra.mxu0 0
        %1734 = vmatprep.subr.bf16.mxu0 0
        %1735 = vmatpush1.bf16.msra.mxu0 0
        %1736 = vmatprep.subr.bf16.mxu0 0
        %1737 = vmatpush1.bf16.msra.mxu0 0
        %1738 = vmatprep.mubr.bf16.mxu0 0
        %1739 = vmatmul.mubr.bf16.gmra.mrb[0].mxu0 %v1701
        %v1740 = vpop.f32.mrb[0].mxu0
        %v1741 = vadd.f32 0.0, %v1740
        %v1742 = vpop.f32.mrb[0].mxu0
        %v1743 = vpop.f32.mrb[0].mxu0
        %v1744 = vpop.f32.mrb[0].mxu0
        %1745 = vdwg.mxu0
        %v1747 = vsel %vm1170, %v1603, 0
        %v1750 = vsel %vm1418, %v1607, 0
        %1752 = vmatprep.subr.bf16.mxu0 0
        %1753 = vmatpush1.bf16.msra.mxu0 %v1750
        %1754 = vmatprep.subr.bf16.mxu0 0
        %1755 = vmatpush1.bf16.msra.mxu0 0
        %1756 = vmatprep.subr.bf16.mxu0 0
        %1757 = vmatpush1.bf16.msra.mxu0 0
        %1758 = vmatprep.subr.bf16.mxu0 0
        %1759 = vmatpush1.bf16.msra.mxu0 0
        %1760 = vmatprep.subr.bf16.mxu0 0
        %1761 = vmatpush1.bf16.msra.mxu0 0
        %1762 = vmatprep.subr.bf16.mxu0 0
        %1763 = vmatpush1.bf16.msra.mxu0 0
        %1764 = vmatprep.subr.bf16.mxu0 0
        %1765 = vmatpush1.bf16.msra.mxu0 0
        %1766 = vmatprep.subr.bf16.mxu0 0
        %1767 = vmatpush1.bf16.msra.mxu0 0
        %1768 = vmatprep.subr.bf16.mxu0 0
        %1769 = vmatpush1.bf16.msra.mxu0 0
        %1770 = vmatprep.subr.bf16.mxu0 0
        %1771 = vmatpush1.bf16.msra.mxu0 0
        %1772 = vmatprep.subr.bf16.mxu0 0
        %1773 = vmatpush1.bf16.msra.mxu0 0
        %1774 = vmatprep.subr.bf16.mxu0 0
        %1775 = vmatpush1.bf16.msra.mxu0 0
        %1776 = vmatprep.subr.bf16.mxu0 0
        %1777 = vmatpush1.bf16.msra.mxu0 0
        %1778 = vmatprep.subr.bf16.mxu0 0
        %1779 = vmatpush1.bf16.msra.mxu0 0
        %1780 = vmatprep.subr.bf16.mxu0 0
        %1781 = vmatpush1.bf16.msra.mxu0 0
        %1782 = vmatprep.subr.bf16.mxu0 0
        %1783 = vmatpush1.bf16.msra.mxu0 0
        %1784 = vmatprep.mubr.bf16.mxu0 0
        %1785 = vmatmul.mubr.bf16.gmra.mrb[0].mxu0 %v1747
        %v1786 = vpop.f32.mrb[0].mxu0
        %v1787 = vadd.f32 0.0, %v1786
        %v1788 = vpop.f32.mrb[0].mxu0
        %v1789 = vpop.f32.mrb[0].mxu0
        %v1790 = vpop.f32.mrb[0].mxu0
        %1791 = vdwg.mxu0
        %v1792 = vsel %vm919, %v1649, 0.0
        %v1793 = vsel %vm919, %v1695, 0.0
        %v1794 = vadd.f32 %v1792, %v1793
        %v1795 = vsel %vm919, %v1741, 0.0
        %v1796 = vadd.f32 %v1794, %v1795
        %v1797 = vsel %vm919, %v1787, 0.0
        %v1798 = vadd.f32 %v1796, %v1797
        %v1799 = vld [vmem:[#allocation10] sm:$0x1]
        %v1801 = vlaneseq
        %v1802 = vshrl.u32 %v1801, 7
        %v1803 = vsub.s32 0, %v1802
        %v1804 = vrot.slane %v1799, %v1803
        %v1806 = vadd.f32 %v1798, %v1804
        %1807 = vst.msk [vmem:[%s455] sm:$0xff] %vm919, %v1806
        %s1808 = sand.u32 %s271, 1
        %s1809 = scalar_lea.sflag [#allocation6], %s1808
        %s1810 = sand.u32 %s271, 1
        %s1811 = smul.addr %s1810, 8
        %s1812 = scalar_lea.vmem [#allocation13], %s1811
        // Predicated region
        $region85: #{tpu_custom_call.1} parent=59 // pred_check
          %p1813 = pneg %p281
        $region86: #{tpu_custom_call.1} parent=59 // pred_check_branch
          %1815 = sbr.rel (%p1813) target = $region88
        $region87: #{tpu_custom_call.1} parent=59 // pred_region
          %s1817 = ssub.s32 128, 128
          %1818 = vsyncadd %s1809, %s1817
          %s1819 = sadd.s32 %s34, %s33
          %s1820 = smul.addr %s1819, 128
          %s1821 = scalar_lea.hbm %s10, %s1820
          %s1823 = sshll.u32 %s1812, 4
          %s1824 = int_to_ptr.vmem [resolvable:$true] %s1823
          %1826 = dma.vmem_to_hbm [thread:$0]  %s1824, 128, %s1821, %s1809
        $region88: #{tpu_custom_call.1} parent=59 // pred_fallthru
          _
      $region60: #{tpu_custom_call.1} parent=5 // pred_fallthru
        _
      %p1827 = scmp.le.s32.totalorder 2, %s24
      // Predicated region
      $region89: #{tpu_custom_call.1} parent=5 // pred_check
        %p1828 = pneg %p1827
      $region90: #{tpu_custom_call.1} parent=5 // pred_check_branch
        %1830 = sbr.rel (%p1828) target = $region92
      $region91: #{tpu_custom_call.1} parent=5 // pred_region
        %s1831 = ssub.s32 %s24, 2
        // Predicated region
        $region93: #{tpu_custom_call.1} parent=91 // pred_check
          %p1832 = pneg %p287
        $region94: #{tpu_custom_call.1} parent=91 // pred_check_branch
          %1834 = sbr.rel (%p1832) target = $region96
        $region95: #{tpu_custom_call.1} parent=91 // pred_region
          %s1835 = sand.u32 %s272, 1
          %s1836 = scalar_lea.sflag [#allocation6], %s1835
          %s1837 = sand.u32 %s272, 1
          %s1838 = smul.addr %s1837, 8
          %s1839 = scalar_lea.vmem [#allocation13], %s1838
          %1840 = dma.done %s1836, 128
        $region96: #{tpu_custom_call.1} parent=91 // pred_fallthru
          _
      $region92: #{tpu_custom_call.1} parent=5 // pred_fallthru
        _
    $region6: #{tpu_custom_call.1} parent=1 // loop_footer
      %s28 = sadd.s32 1, %s24
    $region7: #{tpu_custom_call.1} parent=1 // loop_footer_branch
      %23 = sbr.rel target = $region3
    $region8: #{tpu_custom_call.1} parent=1 // loop_exit
      _
    %1841 = vsyncpa [#allocation5], 1
    %s1842 = scalar_lea.sflag [#allocation5], 1
    %1843 = vsyncpa %s1842, 1
    %1844 = vsyncpa [#allocation8], 1
    %1845 = vsyncpa [#allocation11], 1
    %1846 = vsyncpa [#allocation6], 1
    %s1847 = scalar_lea.sflag [#allocation6], 1
    %1848 = vsyncpa %s1847, 1

</llo_original>
